<compile_context>
chip_gen: v5e
topology: v5e:2x2
jax: 0.10.0
libtpu: 0.0.40
codegen_flags: <defaults>
</compile_context>

<pallas_src>
import functools
import math

import jax
import jax.numpy as jnp
from jax.experimental import pallas as pl
from jax.experimental.pallas import tpu as pltpu

# ---------------- synthetic small RoBERTa config ----------------
VOCAB_SIZE   = 50
HIDDEN       = 32
NUM_LAYERS   = 2
NUM_HEADS    = 2
HEAD_DIM     = HIDDEN // NUM_HEADS
INTERMEDIATE = 64
MAX_POS      = 20
TYPE_VOCAB   = 2
PAD_ID       = 1          # RoBERTa padding_idx
LN_EPS       = 1e-5
BATCH        = 2
SEQ          = 8


# ---------------- in-kernel helpers (operate on values, not refs) ----------------
def _layernorm(x, g, b):
    mu = jnp.mean(x, axis=-1, keepdims=True)
    var = jnp.mean(jnp.square(x - mu), axis=-1, keepdims=True)
    return (x - mu) * jax.lax.rsqrt(var + LN_EPS) * g + b


def _gelu(x):
    # TODO(synk): HF RoBERTa uses exact erf GELU; tanh approximation used here
    # for Pallas/Mosaic portability (negligible numerical difference).
    return 0.5 * x * (1.0 + jnp.tanh(0.7978845608028654 * (x + 0.044715 * x * x * x)))


# ---------------- Pallas kernels ----------------
def _emb_ln_kernel(we_ref, pe_ref, te_ref, g_ref, b_ref, o_ref):
    # Fused embedding sum (word + position + token-type) + LayerNorm.
    x = (we_ref[...].astype(jnp.float32)
         + pe_ref[...].astype(jnp.float32)
         + te_ref[...].astype(jnp.float32))
    o_ref[...] = _layernorm(x, g_ref[...], b_ref[...])


def embedding_sum_layernorm(we, pe, te, gamma, beta):
    M, H = we.shape
    full = lambda shape: pl.BlockSpec(shape, lambda i, _s=shape: (0,) * len(_s))
    return pl.pallas_call(
        _emb_ln_kernel,
        out_shape=jax.ShapeDtypeStruct((M, H), jnp.float32),
        grid=(1,),
        in_specs=[full((M, H)), full((M, H)), full((M, H)),
                  full((1, H)), full((1, H))],
        out_specs=full((M, H)),
    )(we, pe, te, gamma, beta)


def _layer_kernel(h_ref, mask_ref,
                  wqkv_ref, bqkv_ref, wo_ref, bo_ref, ag_ref, ab_ref,
                  wi_ref, bi_ref, wf_ref, bf_ref, og_ref, ob_ref,
                  o_ref, ctx_ref,
                  *, batch, seq, heads, head_dim, scale):
    """One full transformer encoder layer, fully fused in VMEM."""
    hidden = heads * head_dim
    x = h_ref[...].astype(jnp.float32)                       # (B*S, H)

    # ---- fused QKV projection: one (M, H) x (H, 3H) MXU pass ----
    qkv = jnp.dot(x, wqkv_ref[...], preferred_element_type=jnp.float32) + bqkv_ref[...]
    q = qkv[:, 0 * hidden:1 * hidden]
    k = qkv[:, 1 * hidden:2 * hidden]
    v = qkv[:, 2 * hidden:3 * hidden]

    mask = mask_ref[...]                                     # (B, S) additive bias

    # ---- per (batch, head) attention; trace-time unrolled (tiny shapes) ----
    for b in range(batch):
        r0 = b * seq                                          # static offsets
        qb = q[r0:r0 + seq, :]                                # (S, H)
        kb = k[r0:r0 + seq, :]
        vb = v[r0:r0 + seq, :]
        bias = mask[b:b + 1, :]                               # (1, S) broadcast over queries
        for hd in range(heads):
            c0 = hd * head_dim
            qh = qb[:, c0:c0 + head_dim]                      # (S, D)
            kh = kb[:, c0:c0 + head_dim]
            vh = vb[:, c0:c0 + head_dim]
            s = jnp.dot(qh, kh.T, preferred_element_type=jnp.float32) * scale + bias
            s = s - jnp.max(s, axis=-1, keepdims=True)
            p = jnp.exp(s)
            # EUP approx reciprocal instead of a VALU divide.
            p = p * pl.reciprocal(jnp.sum(p, axis=-1, keepdims=True), approx=True)
            ctx_ref[pl.ds(r0, seq), pl.ds(c0, head_dim)] = jnp.dot(
                p, vh, preferred_element_type=jnp.float32)

    ctx = ctx_ref[...]                                       # (B*S, H), heads merged in VMEM

    # ---- attention output projection + residual + LayerNorm ----
    attn_out = jnp.dot(ctx, wo_ref[...], preferred_element_type=jnp.float32) + bo_ref[...]
    h1 = _layernorm(attn_out + x, ag_ref[...], ab_ref[...])

    # ---- feed-forward (GELU) + residual + LayerNorm ----
    inter = jnp.dot(h1, wi_ref[...], preferred_element_type=jnp.float32) + bi_ref[...]
    inter = _gelu(inter)
    ffn = jnp.dot(inter, wf_ref[...], preferred_element_type=jnp.float32) + bf_ref[...]
    o_ref[...] = _layernorm(ffn + h1, og_ref[...], ob_ref[...])


def encoder_layer(h, mask_bias, layer):
    M, H = h.shape
    B, S = mask_bias.shape

    def full(shape):
        return pl.BlockSpec(shape, lambda i, _s=shape: (0,) * len(_s))

    kern = functools.partial(
        _layer_kernel, batch=B, seq=S, heads=NUM_HEADS, head_dim=HEAD_DIM,
        scale=1.0 / math.sqrt(HEAD_DIM))

    return pl.pallas_call(
        kern,
        out_shape=jax.ShapeDtypeStruct((M, H), jnp.float32),
        grid=(1,),
        in_specs=[
            full((M, H)),                 # h
            full((B, S)),                 # additive attention-mask bias
            full((H, 3 * H)),             # fused Wqkv
            full((1, 3 * H)),             # fused bqkv
            full((H, H)),                 # Wo
            full((1, H)),                 # bo
            full((1, H)),                 # attn LN gamma
            full((1, H)),                 # attn LN beta
            full((H, INTERMEDIATE)),      # Wi
            full((1, INTERMEDIATE)),      # bi
            full((INTERMEDIATE, H)),      # Wf
            full((1, H)),                 # bf
            full((1, H)),                 # out LN gamma
            full((1, H)),                 # out LN beta
        ],
        out_specs=full((M, H)),
        scratch_shapes=[pltpu.VMEM((M, H), jnp.float32)],     # ctx (heads merged)
    )(h, mask_bias,
      layer["wqkv"], layer["bqkv"], layer["wo"], layer["bo"],
      layer["attn_ln_g"], layer["attn_ln_b"],
      layer["wi"], layer["bi"], layer["wf"], layer["bf"],
      layer["out_ln_g"], layer["out_ln_b"])


# ---------------- parameters (deterministic synthetic init) ----------------
def init_params(key):
    def normal(k, shape):
        return jax.random.normal(k, shape, jnp.float32) * 0.02

    keys = jax.random.split(key, 3 + NUM_LAYERS)
    params = {
        "word_emb": normal(keys[0], (VOCAB_SIZE, HIDDEN)),
        "pos_emb":  normal(keys[1], (MAX_POS, HIDDEN)),
        "type_emb": normal(keys[2], (TYPE_VOCAB, HIDDEN)),
        "emb_ln_g": jnp.ones((1, HIDDEN), jnp.float32),
        "emb_ln_b": jnp.zeros((1, HIDDEN), jnp.float32),
        "layers": [],
    }
    for l in range(NUM_LAYERS):
        lk = jax.random.split(keys[3 + l], 4)
        params["layers"].append({
            # Wq, Wk, Wv fused into a single (H, 3H) weight -> one GEMM.
            "wqkv": normal(lk[0], (HIDDEN, 3 * HIDDEN)),
            "bqkv": jnp.zeros((1, 3 * HIDDEN), jnp.float32),
            "wo":   normal(lk[1], (HIDDEN, HIDDEN)),
            "bo":   jnp.zeros((1, HIDDEN), jnp.float32),
            "attn_ln_g": jnp.ones((1, HIDDEN), jnp.float32),
            "attn_ln_b": jnp.zeros((1, HIDDEN), jnp.float32),
            "wi":   normal(lk[2], (HIDDEN, INTERMEDIATE)),
            "bi":   jnp.zeros((1, INTERMEDIATE), jnp.float32),
            "wf":   normal(lk[3], (INTERMEDIATE, HIDDEN)),
            "bf":   jnp.zeros((1, HIDDEN), jnp.float32),
            "out_ln_g": jnp.ones((1, HIDDEN), jnp.float32),
            "out_ln_b": jnp.zeros((1, HIDDEN), jnp.float32),
        })
    return params


# ---------------- forward (RoBERTaEncoder.forward equivalent) ----------------
def roberta_encoder(params, text_feats):
    input_ids      = text_feats[:, 0]
    attention_mask = text_feats[:, 1].astype(jnp.float32)
    token_type_ids = text_feats[:, 2]
    B, S = input_ids.shape

    # RoBERTa position ids derived from non-padding tokens.
    ne = (input_ids != PAD_ID).astype(jnp.int32)
    position_ids = jnp.cumsum(ne, axis=1) * ne + PAD_ID

    # TODO(synk): embedding-table gathers kept in plain JAX (data-dependent
    # gather glue); sum + LayerNorm fused in a single Pallas kernel.
    we = params["word_emb"][input_ids].reshape(B * S, HIDDEN)
    pe = params["pos_emb"][position_ids].reshape(B * S, HIDDEN)
    te = params["type_emb"][token_type_ids].reshape(B * S, HIDDEN)
    h = embedding_sum_layernorm(we, pe, te, params["emb_ln_g"], params["emb_ln_b"])

    # additive attention-mask bias [B, S] (broadcast over heads/queries in-kernel)
    mask_bias = (1.0 - attention_mask) * (-1e9)

    # One fused pallas_call per transformer layer.
    for layer in params["layers"]:
        h = encoder_layer(h, mask_bias, layer)

    return h.reshape(B, S, HIDDEN)   # last_hidden_state


if __name__ == "__main__":
    key = jax.random.PRNGKey(0)
    pkey, dkey = jax.random.split(key)
    params = init_params(pkey)

    input_ids = jax.random.randint(dkey, (BATCH, SEQ), 2, VOCAB_SIZE, dtype=jnp.int32)
    input_ids = input_ids.at[1, 6:].set(PAD_ID)              # some padding
    attn_mask = (input_ids != PAD_ID).astype(jnp.int32)
    token_type_ids = jnp.zeros((BATCH, SEQ), jnp.int32)
    text_feats = jnp.stack([input_ids, attn_mask, token_type_ids], axis=1)  # [B, 3, S]

    out = jax.jit(roberta_encoder)(params, text_feats)
    jax.block_until_ready(out)
    assert out.shape == (BATCH, SEQ, HIDDEN) and out.dtype == jnp.float32
    assert bool(jnp.all(jnp.isfinite(out)))
    print("KERNEL_OK")
</pallas_src>

<mosaic_0001>
module attributes {stable_mosaic.version = 11 : i64} {
  func.func @_emb_ln_kernel(%arg0: i32, %arg1: memref<16x32xf32, #tpu.memory_space<vmem>>, %arg2: memref<16x32xf32, #tpu.memory_space<vmem>>, %arg3: memref<16x32xf32, #tpu.memory_space<vmem>>, %arg4: memref<1x32xf32, #tpu.memory_space<vmem>>, %arg5: memref<1x32xf32, #tpu.memory_space<vmem>>, %arg6: memref<16x32xf32, #tpu.memory_space<vmem>>) attributes {dimension_semantics = [#tpu.dimension_semantics<arbitrary>], iteration_bounds = array<i64: 1>, scalar_prefetch = 0 : i64, scratch_operands = 0 : i64, tpu.core_type = #tpu.core_type<tc>, window_params = [{pipeline_mode = #tpu.pipeline_mode<synchronous>, transform_indices = @transform_0, window_bounds = array<i64: 16, 32>}, {pipeline_mode = #tpu.pipeline_mode<synchronous>, transform_indices = @transform_1, window_bounds = array<i64: 16, 32>}, {pipeline_mode = #tpu.pipeline_mode<synchronous>, transform_indices = @transform_2, window_bounds = array<i64: 16, 32>}, {pipeline_mode = #tpu.pipeline_mode<synchronous>, transform_indices = @transform_3, window_bounds = array<i64: 1, 32>}, {pipeline_mode = #tpu.pipeline_mode<synchronous>, transform_indices = @transform_4, window_bounds = array<i64: 1, 32>}, {pipeline_mode = #tpu.pipeline_mode<synchronous>, transform_indices = @transform_5, window_bounds = array<i64: 16, 32>}]} {
    %c0 = arith.constant 0 : index
    %c0_0 = arith.constant 0 : index
    %0 = vector.load %arg1[%c0, %c0_0] : memref<16x32xf32, #tpu.memory_space<vmem>>, vector<16x32xf32>
    %c0_1 = arith.constant 0 : index
    %c0_2 = arith.constant 0 : index
    %1 = vector.load %arg2[%c0_1, %c0_2] : memref<16x32xf32, #tpu.memory_space<vmem>>, vector<16x32xf32>
    %2 = arith.addf %0, %1 : vector<16x32xf32>
    %c0_3 = arith.constant 0 : index
    %c0_4 = arith.constant 0 : index
    %3 = vector.load %arg3[%c0_3, %c0_4] : memref<16x32xf32, #tpu.memory_space<vmem>>, vector<16x32xf32>
    %4 = arith.addf %2, %3 : vector<16x32xf32>
    %c0_5 = arith.constant 0 : index
    %c0_6 = arith.constant 0 : index
    %5 = vector.load %arg4[%c0_5, %c0_6] : memref<1x32xf32, #tpu.memory_space<vmem>>, vector<1x32xf32>
    %c0_7 = arith.constant 0 : index
    %c0_8 = arith.constant 0 : index
    %6 = vector.load %arg5[%c0_7, %c0_8] : memref<1x32xf32, #tpu.memory_space<vmem>>, vector<1x32xf32>
    %cst = arith.constant dense<0.000000e+00> : vector<16xf32>
    %7 = vector.multi_reduction <add>, %4, %cst [1] : vector<16x32xf32> to vector<16xf32>
    %8 = vector.shape_cast %7 : vector<16xf32> to vector<16x1xf32>
    %cst_9 = arith.constant 3.200000e+01 : f32
    %9 = vector.broadcast %cst_9 : f32 to vector<16x1xf32>
    %10 = arith.divf %8, %9 : vector<16x1xf32>
    %11 = vector.broadcast %10 : vector<16x1xf32> to vector<16x32xf32>
    %12 = arith.subf %4, %11 : vector<16x32xf32>
    %13 = arith.mulf %12, %12 : vector<16x32xf32>
    %cst_10 = arith.constant dense<0.000000e+00> : vector<16xf32>
    %14 = vector.multi_reduction <add>, %13, %cst_10 [1] : vector<16x32xf32> to vector<16xf32>
    %15 = vector.shape_cast %14 : vector<16xf32> to vector<16x1xf32>
    %cst_11 = arith.constant 3.200000e+01 : f32
    %16 = vector.broadcast %cst_11 : f32 to vector<16x1xf32>
    %17 = arith.divf %15, %16 : vector<16x1xf32>
    %18 = vector.broadcast %10 : vector<16x1xf32> to vector<16x32xf32>
    %19 = arith.subf %4, %18 : vector<16x32xf32>
    %cst_12 = arith.constant 9.99999974E-6 : f32
    %20 = vector.broadcast %cst_12 : f32 to vector<16x1xf32>
    %21 = arith.addf %17, %20 : vector<16x1xf32>
    %22 = math.rsqrt %21 : vector<16x1xf32>
    %23 = vector.broadcast %22 : vector<16x1xf32> to vector<16x32xf32>
    %24 = arith.mulf %19, %23 : vector<16x32xf32>
    %25 = vector.broadcast %5 : vector<1x32xf32> to vector<16x32xf32>
    %26 = arith.mulf %24, %25 : vector<16x32xf32>
    %27 = vector.broadcast %6 : vector<1x32xf32> to vector<16x32xf32>
    %28 = arith.addf %26, %27 : vector<16x32xf32>
    %c0_13 = arith.constant 0 : index
    %c0_14 = arith.constant 0 : index
    %29 = vector.load %arg6[%c0_13, %c0_14] : memref<16x32xf32, #tpu.memory_space<vmem>>, vector<16x32xf32>
    tpu.vector_store %arg6[%c0_13, %c0_14], %28 {strides = array<i32>} : memref<16x32xf32, #tpu.memory_space<vmem>>, vector<16x32xf32>,
    return
  }
  func.func @transform_0(%arg0: i32) -> (i32, i32) {
    %c0_i32 = arith.constant 0 : i32
    %c0_i32_0 = arith.constant 0 : i32
    %c0_i32_1 = arith.constant 0 : i32
    return %c0_i32, %c0_i32_0 : i32, i32
  }
  func.func @transform_1(%arg0: i32) -> (i32, i32) {
    %c0_i32 = arith.constant 0 : i32
    %c0_i32_0 = arith.constant 0 : i32
    %c0_i32_1 = arith.constant 0 : i32
    return %c0_i32, %c0_i32_0 : i32, i32
  }
  func.func @transform_2(%arg0: i32) -> (i32, i32) {
    %c0_i32 = arith.constant 0 : i32
    %c0_i32_0 = arith.constant 0 : i32
    %c0_i32_1 = arith.constant 0 : i32
    return %c0_i32, %c0_i32_0 : i32, i32
  }
  func.func @transform_3(%arg0: i32) -> (i32, i32) {
    %c0_i32 = arith.constant 0 : i32
    %c0_i32_0 = arith.constant 0 : i32
    %c0_i32_1 = arith.constant 0 : i32
    return %c0_i32, %c0_i32_0 : i32, i32
  }
  func.func @transform_4(%arg0: i32) -> (i32, i32) {
    %c0_i32 = arith.constant 0 : i32
    %c0_i32_0 = arith.constant 0 : i32
    %c0_i32_1 = arith.constant 0 : i32
    return %c0_i32, %c0_i32_0 : i32, i32
  }
  func.func @transform_5(%arg0: i32) -> (i32, i32) {
    %c0_i32 = arith.constant 0 : i32
    %c0_i32_0 = arith.constant 0 : i32
    %c0_i32_1 = arith.constant 0 : i32
    return %c0_i32, %c0_i32_0 : i32, i32
  }
}

module attributes {stable_mosaic.version = 11 : i64} {
  func.func @_layer_kernel(%arg0: i32, %arg1: memref<16x32xf32, #tpu.memory_space<vmem>>, %arg2: memref<2x8xf32, #tpu.memory_space<vmem>>, %arg3: memref<32x96xf32, #tpu.memory_space<vmem>>, %arg4: memref<1x96xf32, #tpu.memory_space<vmem>>, %arg5: memref<32x32xf32, #tpu.memory_space<vmem>>, %arg6: memref<1x32xf32, #tpu.memory_space<vmem>>, %arg7: memref<1x32xf32, #tpu.memory_space<vmem>>, %arg8: memref<1x32xf32, #tpu.memory_space<vmem>>, %arg9: memref<32x64xf32, #tpu.memory_space<vmem>>, %arg10: memref<1x64xf32, #tpu.memory_space<vmem>>, %arg11: memref<64x32xf32, #tpu.memory_space<vmem>>, %arg12: memref<1x32xf32, #tpu.memory_space<vmem>>, %arg13: memref<1x32xf32, #tpu.memory_space<vmem>>, %arg14: memref<1x32xf32, #tpu.memory_space<vmem>>, %arg15: memref<16x32xf32, #tpu.memory_space<vmem>>, %arg16: memref<16x32xf32, #tpu.memory_space<vmem>>) attributes {dimension_semantics = [#tpu.dimension_semantics<arbitrary>], iteration_bounds = array<i64: 1>, scalar_prefetch = 0 : i64, scratch_operands = 1 : i64, tpu.core_type = #tpu.core_type<tc>, window_params = [{pipeline_mode = #tpu.pipeline_mode<synchronous>, transform_indices = @transform_0, window_bounds = array<i64: 16, 32>}, {pipeline_mode = #tpu.pipeline_mode<synchronous>, transform_indices = @transform_1, window_bounds = array<i64: 2, 8>}, {pipeline_mode = #tpu.pipeline_mode<synchronous>, transform_indices = @transform_2, window_bounds = array<i64: 32, 96>}, {pipeline_mode = #tpu.pipeline_mode<synchronous>, transform_indices = @transform_3, window_bounds = array<i64: 1, 96>}, {pipeline_mode = #tpu.pipeline_mode<synchronous>, transform_indices = @transform_4, window_bounds = array<i64: 32, 32>}, {pipeline_mode = #tpu.pipeline_mode<synchronous>, transform_indices = @transform_5, window_bounds = array<i64: 1, 32>}, {pipeline_mode = #tpu.pipeline_mode<synchronous>, transform_indices = @transform_6, window_bounds = array<i64: 1, 32>}, {pipeline_mode = #tpu.pipeline_mode<synchronous>, transform_indices = @transform_7, window_bounds = array<i64: 1, 32>}, {pipeline_mode = #tpu.pipeline_mode<synchronous>, transform_indices = @transform_8, window_bounds = array<i64: 32, 64>}, {pipeline_mode = #tpu.pipeline_mode<synchronous>, transform_indices = @transform_9, window_bounds = array<i64: 1, 64>}, {pipeline_mode = #tpu.pipeline_mode<synchronous>, transform_indices = @transform_10, window_bounds = array<i64: 64, 32>}, {pipeline_mode = #tpu.pipeline_mode<synchronous>, transform_indices = @transform_11, window_bounds = array<i64: 1, 32>}, {pipeline_mode = #tpu.pipeline_mode<synchronous>, transform_indices = @transform_12, window_bounds = array<i64: 1, 32>}, {pipeline_mode = #tpu.pipeline_mode<synchronous>, transform_indices = @transform_13, window_bounds = array<i64: 1, 32>}, {pipeline_mode = #tpu.pipeline_mode<synchronous>, transform_indices = @transform_14, window_bounds = array<i64: 16, 32>}]} {
    %c0 = arith.constant 0 : index
    %c0_0 = arith.constant 0 : index
    %0 = vector.load %arg1[%c0, %c0_0] : memref<16x32xf32, #tpu.memory_space<vmem>>, vector<16x32xf32>
    %c0_1 = arith.constant 0 : index
    %c0_2 = arith.constant 0 : index
    %1 = vector.load %arg3[%c0_1, %c0_2] : memref<32x96xf32, #tpu.memory_space<vmem>>, vector<32x96xf32>
    %cst = arith.constant dense<0.000000e+00> : vector<16x96xf32>
    %2 = tpu.matmul %0, %1, %cst {dimension_numbers = #tpu.dot_dimension_numbers<[1], [0], [0], [1], [0, 0, 1, 1], [], []>} : vector<16x32xf32>, vector<32x96xf32>, vector<16x96xf32> -> vector<16x96xf32>
    %c0_3 = arith.constant 0 : index
    %c0_4 = arith.constant 0 : index
    %3 = vector.load %arg4[%c0_3, %c0_4] : memref<1x96xf32, #tpu.memory_space<vmem>>, vector<1x96xf32>
    %4 = vector.broadcast %3 : vector<1x96xf32> to vector<16x96xf32>
    %5 = arith.addf %2, %4 : vector<16x96xf32>
    %6 = vector.extract_strided_slice %5 {offsets = [0, 0], sizes = [16, 32], strides = [1, 1]} : vector<16x96xf32> to vector<16x32xf32>
    %7 = vector.extract_strided_slice %5 {offsets = [0, 32], sizes = [16, 32], strides = [1, 1]} : vector<16x96xf32> to vector<16x32xf32>
    %8 = vector.extract_strided_slice %5 {offsets = [0, 64], sizes = [16, 32], strides = [1, 1]} : vector<16x96xf32> to vector<16x32xf32>
    %c0_5 = arith.constant 0 : index
    %c0_6 = arith.constant 0 : index
    %9 = vector.load %arg2[%c0_5, %c0_6] : memref<2x8xf32, #tpu.memory_space<vmem>>, vector<2x8xf32>
    %10 = vector.extract_strided_slice %6 {offsets = [0, 0], sizes = [8, 32], strides = [1, 1]} : vector<16x32xf32> to vector<8x32xf32>
    %11 = vector.extract_strided_slice %7 {offsets = [0, 0], sizes = [8, 32], strides = [1, 1]} : vector<16x32xf32> to vector<8x32xf32>
    %12 = vector.extract_strided_slice %8 {offsets = [0, 0], sizes = [8, 32], strides = [1, 1]} : vector<16x32xf32> to vector<8x32xf32>
    %13 = vector.extract_strided_slice %9 {offsets = [0, 0], sizes = [1, 8], strides = [1, 1]} : vector<2x8xf32> to vector<1x8xf32>
    %14 = vector.extract_strided_slice %10 {offsets = [0, 0], sizes = [8, 16], strides = [1, 1]} : vector<8x32xf32> to vector<8x16xf32>
    %15 = vector.extract_strided_slice %11 {offsets = [0, 0], sizes = [8, 16], strides = [1, 1]} : vector<8x32xf32> to vector<8x16xf32>
    %16 = vector.extract_strided_slice %12 {offsets = [0, 0], sizes = [8, 16], strides = [1, 1]} : vector<8x32xf32> to vector<8x16xf32>
    %17 = tpu.transpose %15, [1, 0] : vector<8x16xf32> -> vector<16x8xf32>
    %cst_7 = arith.constant dense<0.000000e+00> : vector<8x8xf32>
    %18 = tpu.matmul %14, %17, %cst_7 {dimension_numbers = #tpu.dot_dimension_numbers<[1], [0], [0], [1], [0, 0, 1, 1], [], []>} : vector<8x16xf32>, vector<16x8xf32>, vector<8x8xf32> -> vector<8x8xf32>
    %cst_8 = arith.constant 2.500000e-01 : f32
    %19 = vector.broadcast %cst_8 : f32 to vector<8x8xf32>
    %20 = arith.mulf %18, %19 : vector<8x8xf32>
    %21 = vector.broadcast %13 : vector<1x8xf32> to vector<8x8xf32>
    %22 = arith.addf %20, %21 : vector<8x8xf32>
    %cst_9 = arith.constant dense<0xFF800000> : vector<8xf32>
    %23 = vector.multi_reduction <maximumf>, %22, %cst_9 [1] : vector<8x8xf32> to vector<8xf32>
    %24 = vector.shape_cast %23 : vector<8xf32> to vector<8x1xf32>
    %25 = vector.broadcast %24 : vector<8x1xf32> to vector<8x8xf32>
    %26 = arith.subf %22, %25 : vector<8x8xf32>
    %27 = math.exp %26 : vector<8x8xf32>
    %cst_10 = arith.constant dense<0.000000e+00> : vector<8xf32>
    %28 = vector.multi_reduction <add>, %27, %cst_10 [1] : vector<8x8xf32> to vector<8xf32>
    %29 = vector.shape_cast %28 : vector<8xf32> to vector<8x1xf32>
    %30 = tpu.reciprocal %29 {approx = true} : vector<8x1xf32> -> vector<8x1xf32>
    %31 = vector.broadcast %30 : vector<8x1xf32> to vector<8x8xf32>
    %32 = arith.mulf %27, %31 : vector<8x8xf32>
    %cst_11 = arith.constant dense<0.000000e+00> : vector<8x16xf32>
    %33 = tpu.matmul %32, %16, %cst_11 {dimension_numbers = #tpu.dot_dimension_numbers<[1], [0], [0], [1], [0, 0, 1, 1], [], []>} : vector<8x8xf32>, vector<8x16xf32>, vector<8x16xf32> -> vector<8x16xf32>
    %c0_12 = arith.constant 0 : index
    %c0_13 = arith.constant 0 : index
    %34 = vector.load %arg16[%c0_12, %c0_13] : memref<16x32xf32, #tpu.memory_space<vmem>>, vector<8x16xf32>
    tpu.vector_store %arg16[%c0_12, %c0_13], %33 {strides = array<i32>} : memref<16x32xf32, #tpu.memory_space<vmem>>, vector<8x16xf32>,
    %35 = vector.extract_strided_slice %10 {offsets = [0, 16], sizes = [8, 16], strides = [1, 1]} : vector<8x32xf32> to vector<8x16xf32>
    %36 = vector.extract_strided_slice %11 {offsets = [0, 16], sizes = [8, 16], strides = [1, 1]} : vector<8x32xf32> to vector<8x16xf32>
    %37 = vector.extract_strided_slice %12 {offsets = [0, 16], sizes = [8, 16], strides = [1, 1]} : vector<8x32xf32> to vector<8x16xf32>
    %38 = tpu.transpose %36, [1, 0] : vector<8x16xf32> -> vector<16x8xf32>
    %cst_14 = arith.constant dense<0.000000e+00> : vector<8x8xf32>
    %39 = tpu.matmul %35, %38, %cst_14 {dimension_numbers = #tpu.dot_dimension_numbers<[1], [0], [0], [1], [0, 0, 1, 1], [], []>} : vector<8x16xf32>, vector<16x8xf32>, vector<8x8xf32> -> vector<8x8xf32>
    %cst_15 = arith.constant 2.500000e-01 : f32
    %40 = vector.broadcast %cst_15 : f32 to vector<8x8xf32>
    %41 = arith.mulf %39, %40 : vector<8x8xf32>
    %42 = vector.broadcast %13 : vector<1x8xf32> to vector<8x8xf32>
    %43 = arith.addf %41, %42 : vector<8x8xf32>
    %cst_16 = arith.constant dense<0xFF800000> : vector<8xf32>
    %44 = vector.multi_reduction <maximumf>, %43, %cst_16 [1] : vector<8x8xf32> to vector<8xf32>
    %45 = vector.shape_cast %44 : vector<8xf32> to vector<8x1xf32>
    %46 = vector.broadcast %45 : vector<8x1xf32> to vector<8x8xf32>
    %47 = arith.subf %43, %46 : vector<8x8xf32>
    %48 = math.exp %47 : vector<8x8xf32>
    %cst_17 = arith.constant dense<0.000000e+00> : vector<8xf32>
    %49 = vector.multi_reduction <add>, %48, %cst_17 [1] : vector<8x8xf32> to vector<8xf32>
    %50 = vector.shape_cast %49 : vector<8xf32> to vector<8x1xf32>
    %51 = tpu.reciprocal %50 {approx = true} : vector<8x1xf32> -> vector<8x1xf32>
    %52 = vector.broadcast %51 : vector<8x1xf32> to vector<8x8xf32>
    %53 = arith.mulf %48, %52 : vector<8x8xf32>
    %cst_18 = arith.constant dense<0.000000e+00> : vector<8x16xf32>
    %54 = tpu.matmul %53, %37, %cst_18 {dimension_numbers = #tpu.dot_dimension_numbers<[1], [0], [0], [1], [0, 0, 1, 1], [], []>} : vector<8x8xf32>, vector<8x16xf32>, vector<8x16xf32> -> vector<8x16xf32>
    %c0_19 = arith.constant 0 : index
    %c16 = arith.constant 16 : index
    %55 = vector.load %arg16[%c0_19, %c16] : memref<16x32xf32, #tpu.memory_space<vmem>>, vector<8x16xf32>
    tpu.vector_store %arg16[%c0_19, %c16], %54 {strides = array<i32>} : memref<16x32xf32, #tpu.memory_space<vmem>>, vector<8x16xf32>,
    %56 = vector.extract_strided_slice %6 {offsets = [8, 0], sizes = [8, 32], strides = [1, 1]} : vector<16x32xf32> to vector<8x32xf32>
    %57 = vector.extract_strided_slice %7 {offsets = [8, 0], sizes = [8, 32], strides = [1, 1]} : vector<16x32xf32> to vector<8x32xf32>
    %58 = vector.extract_strided_slice %8 {offsets = [8, 0], sizes = [8, 32], strides = [1, 1]} : vector<16x32xf32> to vector<8x32xf32>
    %59 = vector.extract_strided_slice %9 {offsets = [1, 0], sizes = [1, 8], strides = [1, 1]} : vector<2x8xf32> to vector<1x8xf32>
    %60 = vector.extract_strided_slice %56 {offsets = [0, 0], sizes = [8, 16], strides = [1, 1]} : vector<8x32xf32> to vector<8x16xf32>
    %61 = vector.extract_strided_slice %57 {offsets = [0, 0], sizes = [8, 16], strides = [1, 1]} : vector<8x32xf32> to vector<8x16xf32>
    %62 = vector.extract_strided_slice %58 {offsets = [0, 0], sizes = [8, 16], strides = [1, 1]} : vector<8x32xf32> to vector<8x16xf32>
    %63 = tpu.transpose %61, [1, 0] : vector<8x16xf32> -> vector<16x8xf32>
    %cst_20 = arith.constant dense<0.000000e+00> : vector<8x8xf32>
    %64 = tpu.matmul %60, %63, %cst_20 {dimension_numbers = #tpu.dot_dimension_numbers<[1], [0], [0], [1], [0, 0, 1, 1], [], []>} : vector<8x16xf32>, vector<16x8xf32>, vector<8x8xf32> -> vector<8x8xf32>
    %cst_21 = arith.constant 2.500000e-01 : f32
    %65 = vector.broadcast %cst_21 : f32 to vector<8x8xf32>
    %66 = arith.mulf %64, %65 : vector<8x8xf32>
    %67 = vector.broadcast %59 : vector<1x8xf32> to vector<8x8xf32>
    %68 = arith.addf %66, %67 : vector<8x8xf32>
    %cst_22 = arith.constant dense<0xFF800000> : vector<8xf32>
    %69 = vector.multi_reduction <maximumf>, %68, %cst_22 [1] : vector<8x8xf32> to vector<8xf32>
    %70 = vector.shape_cast %69 : vector<8xf32> to vector<8x1xf32>
    %71 = vector.broadcast %70 : vector<8x1xf32> to vector<8x8xf32>
    %72 = arith.subf %68, %71 : vector<8x8xf32>
    %73 = math.exp %72 : vector<8x8xf32>
    %cst_23 = arith.constant dense<0.000000e+00> : vector<8xf32>
    %74 = vector.multi_reduction <add>, %73, %cst_23 [1] : vector<8x8xf32> to vector<8xf32>
    %75 = vector.shape_cast %74 : vector<8xf32> to vector<8x1xf32>
    %76 = tpu.reciprocal %75 {approx = true} : vector<8x1xf32> -> vector<8x1xf32>
    %77 = vector.broadcast %76 : vector<8x1xf32> to vector<8x8xf32>
    %78 = arith.mulf %73, %77 : vector<8x8xf32>
    %cst_24 = arith.constant dense<0.000000e+00> : vector<8x16xf32>
    %79 = tpu.matmul %78, %62, %cst_24 {dimension_numbers = #tpu.dot_dimension_numbers<[1], [0], [0], [1], [0, 0, 1, 1], [], []>} : vector<8x8xf32>, vector<8x16xf32>, vector<8x16xf32> -> vector<8x16xf32>
    %c8 = arith.constant 8 : index
    %c0_25 = arith.constant 0 : index
    %80 = vector.load %arg16[%c8, %c0_25] : memref<16x32xf32, #tpu.memory_space<vmem>>, vector<8x16xf32>
    tpu.vector_store %arg16[%c8, %c0_25], %79 {strides = array<i32>} : memref<16x32xf32, #tpu.memory_space<vmem>>, vector<8x16xf32>,
    %81 = vector.extract_strided_slice %56 {offsets = [0, 16], sizes = [8, 16], strides = [1, 1]} : vector<8x32xf32> to vector<8x16xf32>
    %82 = vector.extract_strided_slice %57 {offsets = [0, 16], sizes = [8, 16], strides = [1, 1]} : vector<8x32xf32> to vector<8x16xf32>
    %83 = vector.extract_strided_slice %58 {offsets = [0, 16], sizes = [8, 16], strides = [1, 1]} : vector<8x32xf32> to vector<8x16xf32>
    %84 = tpu.transpose %82, [1, 0] : vector<8x16xf32> -> vector<16x8xf32>
    %cst_26 = arith.constant dense<0.000000e+00> : vector<8x8xf32>
    %85 = tpu.matmul %81, %84, %cst_26 {dimension_numbers = #tpu.dot_dimension_numbers<[1], [0], [0], [1], [0, 0, 1, 1], [], []>} : vector<8x16xf32>, vector<16x8xf32>, vector<8x8xf32> -> vector<8x8xf32>
    %cst_27 = arith.constant 2.500000e-01 : f32
    %86 = vector.broadcast %cst_27 : f32 to vector<8x8xf32>
    %87 = arith.mulf %85, %86 : vector<8x8xf32>
    %88 = vector.broadcast %59 : vector<1x8xf32> to vector<8x8xf32>
    %89 = arith.addf %87, %88 : vector<8x8xf32>
    %cst_28 = arith.constant dense<0xFF800000> : vector<8xf32>
    %90 = vector.multi_reduction <maximumf>, %89, %cst_28 [1] : vector<8x8xf32> to vector<8xf32>
    %91 = vector.shape_cast %90 : vector<8xf32> to vector<8x1xf32>
    %92 = vector.broadcast %91 : vector<8x1xf32> to vector<8x8xf32>
    %93 = arith.subf %89, %92 : vector<8x8xf32>
    %94 = math.exp %93 : vector<8x8xf32>
    %cst_29 = arith.constant dense<0.000000e+00> : vector<8xf32>
    %95 = vector.multi_reduction <add>, %94, %cst_29 [1] : vector<8x8xf32> to vector<8xf32>
    %96 = vector.shape_cast %95 : vector<8xf32> to vector<8x1xf32>
    %97 = tpu.reciprocal %96 {approx = true} : vector<8x1xf32> -> vector<8x1xf32>
    %98 = vector.broadcast %97 : vector<8x1xf32> to vector<8x8xf32>
    %99 = arith.mulf %94, %98 : vector<8x8xf32>
    %cst_30 = arith.constant dense<0.000000e+00> : vector<8x16xf32>
    %100 = tpu.matmul %99, %83, %cst_30 {dimension_numbers = #tpu.dot_dimension_numbers<[1], [0], [0], [1], [0, 0, 1, 1], [], []>} : vector<8x8xf32>, vector<8x16xf32>, vector<8x16xf32> -> vector<8x16xf32>
    %c8_31 = arith.constant 8 : index
    %c16_32 = arith.constant 16 : index
    %101 = vector.load %arg16[%c8_31, %c16_32] : memref<16x32xf32, #tpu.memory_space<vmem>>, vector<8x16xf32>
    tpu.vector_store %arg16[%c8_31, %c16_32], %100 {strides = array<i32>} : memref<16x32xf32, #tpu.memory_space<vmem>>, vector<8x16xf32>,
    %c0_33 = arith.constant 0 : index
    %c0_34 = arith.constant 0 : index
    %102 = vector.load %arg16[%c0_33, %c0_34] : memref<16x32xf32, #tpu.memory_space<vmem>>, vector<16x32xf32>
    %c0_35 = arith.constant 0 : index
    %c0_36 = arith.constant 0 : index
    %103 = vector.load %arg5[%c0_35, %c0_36] : memref<32x32xf32, #tpu.memory_space<vmem>>, vector<32x32xf32>
    %cst_37 = arith.constant dense<0.000000e+00> : vector<16x32xf32>
    %104 = tpu.matmul %102, %103, %cst_37 {dimension_numbers = #tpu.dot_dimension_numbers<[1], [0], [0], [1], [0, 0, 1, 1], [], []>} : vector<16x32xf32>, vector<32x32xf32>, vector<16x32xf32> -> vector<16x32xf32>
    %c0_38 = arith.constant 0 : index
    %c0_39 = arith.constant 0 : index
    %105 = vector.load %arg6[%c0_38, %c0_39] : memref<1x32xf32, #tpu.memory_space<vmem>>, vector<1x32xf32>
    %106 = vector.broadcast %105 : vector<1x32xf32> to vector<16x32xf32>
    %107 = arith.addf %104, %106 : vector<16x32xf32>
    %108 = arith.addf %107, %0 : vector<16x32xf32>
    %c0_40 = arith.constant 0 : index
    %c0_41 = arith.constant 0 : index
    %109 = vector.load %arg7[%c0_40, %c0_41] : memref<1x32xf32, #tpu.memory_space<vmem>>, vector<1x32xf32>
    %c0_42 = arith.constant 0 : index
    %c0_43 = arith.constant 0 : index
    %110 = vector.load %arg8[%c0_42, %c0_43] : memref<1x32xf32, #tpu.memory_space<vmem>>, vector<1x32xf32>
    %cst_44 = arith.constant dense<0.000000e+00> : vector<16xf32>
    %111 = vector.multi_reduction <add>, %108, %cst_44 [1] : vector<16x32xf32> to vector<16xf32>
    %112 = vector.shape_cast %111 : vector<16xf32> to vector<16x1xf32>
    %cst_45 = arith.constant 3.200000e+01 : f32
    %113 = vector.broadcast %cst_45 : f32 to vector<16x1xf32>
    %114 = arith.divf %112, %113 : vector<16x1xf32>
    %115 = vector.broadcast %114 : vector<16x1xf32> to vector<16x32xf32>
    %116 = arith.subf %108, %115 : vector<16x32xf32>
    %117 = arith.mulf %116, %116 : vector<16x32xf32>
    %cst_46 = arith.constant dense<0.000000e+00> : vector<16xf32>
    %118 = vector.multi_reduction <add>, %117, %cst_46 [1] : vector<16x32xf32> to vector<16xf32>
    %119 = vector.shape_cast %118 : vector<16xf32> to vector<16x1xf32>
    %cst_47 = arith.constant 3.200000e+01 : f32
    %120 = vector.broadcast %cst_47 : f32 to vector<16x1xf32>
    %121 = arith.divf %119, %120 : vector<16x1xf32>
    %122 = vector.broadcast %114 : vector<16x1xf32> to vector<16x32xf32>
    %123 = arith.subf %108, %122 : vector<16x32xf32>
    %cst_48 = arith.constant 9.99999974E-6 : f32
    %124 = vector.broadcast %cst_48 : f32 to vector<16x1xf32>
    %125 = arith.addf %121, %124 : vector<16x1xf32>
    %126 = math.rsqrt %125 : vector<16x1xf32>
    %127 = vector.broadcast %126 : vector<16x1xf32> to vector<16x32xf32>
    %128 = arith.mulf %123, %127 : vector<16x32xf32>
    %129 = vector.broadcast %109 : vector<1x32xf32> to vector<16x32xf32>
    %130 = arith.mulf %128, %129 : vector<16x32xf32>
    %131 = vector.broadcast %110 : vector<1x32xf32> to vector<16x32xf32>
    %132 = arith.addf %130, %131 : vector<16x32xf32>
    %c0_49 = arith.constant 0 : index
    %c0_50 = arith.constant 0 : index
    %133 = vector.load %arg9[%c0_49, %c0_50] : memref<32x64xf32, #tpu.memory_space<vmem>>, vector<32x64xf32>
    %cst_51 = arith.constant dense<0.000000e+00> : vector<16x64xf32>
    %134 = tpu.matmul %132, %133, %cst_51 {dimension_numbers = #tpu.dot_dimension_numbers<[1], [0], [0], [1], [0, 0, 1, 1], [], []>} : vector<16x32xf32>, vector<32x64xf32>, vector<16x64xf32> -> vector<16x64xf32>
    %c0_52 = arith.constant 0 : index
    %c0_53 = arith.constant 0 : index
    %135 = vector.load %arg10[%c0_52, %c0_53] : memref<1x64xf32, #tpu.memory_space<vmem>>, vector<1x64xf32>
    %136 = vector.broadcast %135 : vector<1x64xf32> to vector<16x64xf32>
    %137 = arith.addf %134, %136 : vector<16x64xf32>
    %cst_54 = arith.constant 5.000000e-01 : f32
    %138 = vector.broadcast %cst_54 : f32 to vector<16x64xf32>
    %139 = arith.mulf %138, %137 : vector<16x64xf32>
    %cst_55 = arith.constant 4.471500e-02 : f32
    %140 = vector.broadcast %cst_55 : f32 to vector<16x64xf32>
    %141 = arith.mulf %140, %137 : vector<16x64xf32>
    %142 = arith.mulf %141, %137 : vector<16x64xf32>
    %143 = arith.mulf %142, %137 : vector<16x64xf32>
    %144 = arith.addf %137, %143 : vector<16x64xf32>
    %cst_56 = arith.constant 0.797884583 : f32
    %145 = vector.broadcast %cst_56 : f32 to vector<16x64xf32>
    %146 = arith.mulf %145, %144 : vector<16x64xf32>
    %147 = math.tanh %146 : vector<16x64xf32>
    %cst_57 = arith.constant 1.000000e+00 : f32
    %148 = vector.broadcast %cst_57 : f32 to vector<16x64xf32>
    %149 = arith.addf %148, %147 : vector<16x64xf32>
    %150 = arith.mulf %139, %149 : vector<16x64xf32>
    %c0_58 = arith.constant 0 : index
    %c0_59 = arith.constant 0 : index
    %151 = vector.load %arg11[%c0_58, %c0_59] : memref<64x32xf32, #tpu.memory_space<vmem>>, vector<64x32xf32>
    %cst_60 = arith.constant dense<0.000000e+00> : vector<16x32xf32>
    %152 = tpu.matmul %150, %151, %cst_60 {dimension_numbers = #tpu.dot_dimension_numbers<[1], [0], [0], [1], [0, 0, 1, 1], [], []>} : vector<16x64xf32>, vector<64x32xf32>, vector<16x32xf32> -> vector<16x32xf32>
    %c0_61 = arith.constant 0 : index
    %c0_62 = arith.constant 0 : index
    %153 = vector.load %arg12[%c0_61, %c0_62] : memref<1x32xf32, #tpu.memory_space<vmem>>, vector<1x32xf32>
    %154 = vector.broadcast %153 : vector<1x32xf32> to vector<16x32xf32>
    %155 = arith.addf %152, %154 : vector<16x32xf32>
    %156 = arith.addf %155, %132 : vector<16x32xf32>
    %c0_63 = arith.constant 0 : index
    %c0_64 = arith.constant 0 : index
    %157 = vector.load %arg13[%c0_63, %c0_64] : memref<1x32xf32, #tpu.memory_space<vmem>>, vector<1x32xf32>
    %c0_65 = arith.constant 0 : index
    %c0_66 = arith.constant 0 : index
    %158 = vector.load %arg14[%c0_65, %c0_66] : memref<1x32xf32, #tpu.memory_space<vmem>>, vector<1x32xf32>
    %cst_67 = arith.constant dense<0.000000e+00> : vector<16xf32>
    %159 = vector.multi_reduction <add>, %156, %cst_67 [1] : vector<16x32xf32> to vector<16xf32>
    %160 = vector.shape_cast %159 : vector<16xf32> to vector<16x1xf32>
    %cst_68 = arith.constant 3.200000e+01 : f32
    %161 = vector.broadcast %cst_68 : f32 to vector<16x1xf32>
    %162 = arith.divf %160, %161 : vector<16x1xf32>
    %163 = vector.broadcast %162 : vector<16x1xf32> to vector<16x32xf32>
    %164 = arith.subf %156, %163 : vector<16x32xf32>
    %165 = arith.mulf %164, %164 : vector<16x32xf32>
    %cst_69 = arith.constant dense<0.000000e+00> : vector<16xf32>
    %166 = vector.multi_reduction <add>, %165, %cst_69 [1] : vector<16x32xf32> to vector<16xf32>
    %167 = vector.shape_cast %166 : vector<16xf32> to vector<16x1xf32>
    %cst_70 = arith.constant 3.200000e+01 : f32
    %168 = vector.broadcast %cst_70 : f32 to vector<16x1xf32>
    %169 = arith.divf %167, %168 : vector<16x1xf32>
    %170 = vector.broadcast %162 : vector<16x1xf32> to vector<16x32xf32>
    %171 = arith.subf %156, %170 : vector<16x32xf32>
    %cst_71 = arith.constant 9.99999974E-6 : f32
    %172 = vector.broadcast %cst_71 : f32 to vector<16x1xf32>
    %173 = arith.addf %169, %172 : vector<16x1xf32>
    %174 = math.rsqrt %173 : vector<16x1xf32>
    %175 = vector.broadcast %174 : vector<16x1xf32> to vector<16x32xf32>
    %176 = arith.mulf %171, %175 : vector<16x32xf32>
    %177 = vector.broadcast %157 : vector<1x32xf32> to vector<16x32xf32>
    %178 = arith.mulf %176, %177 : vector<16x32xf32>
    %179 = vector.broadcast %158 : vector<1x32xf32> to vector<16x32xf32>
    %180 = arith.addf %178, %179 : vector<16x32xf32>
    %c0_72 = arith.constant 0 : index
    %c0_73 = arith.constant 0 : index
    %181 = vector.load %arg15[%c0_72, %c0_73] : memref<16x32xf32, #tpu.memory_space<vmem>>, vector<16x32xf32>
    tpu.vector_store %arg15[%c0_72, %c0_73], %180 {strides = array<i32>} : memref<16x32xf32, #tpu.memory_space<vmem>>, vector<16x32xf32>,
    return
  }
  func.func @transform_0(%arg0: i32) -> (i32, i32) {
    %c0_i32 = arith.constant 0 : i32
    %c0_i32_0 = arith.constant 0 : i32
    %c0_i32_1 = arith.constant 0 : i32
    return %c0_i32, %c0_i32_0 : i32, i32
  }
  func.func @transform_1(%arg0: i32) -> (i32, i32) {
    %c0_i32 = arith.constant 0 : i32
    %c0_i32_0 = arith.constant 0 : i32
    %c0_i32_1 = arith.constant 0 : i32
    return %c0_i32, %c0_i32_0 : i32, i32
  }
  func.func @transform_2(%arg0: i32) -> (i32, i32) {
    %c0_i32 = arith.constant 0 : i32
    %c0_i32_0 = arith.constant 0 : i32
    %c0_i32_1 = arith.constant 0 : i32
    return %c0_i32, %c0_i32_0 : i32, i32
  }
  func.func @transform_3(%arg0: i32) -> (i32, i32) {
    %c0_i32 = arith.constant 0 : i32
    %c0_i32_0 = arith.constant 0 : i32
    %c0_i32_1 = arith.constant 0 : i32
    return %c0_i32, %c0_i32_0 : i32, i32
  }
  func.func @transform_4(%arg0: i32) -> (i32, i32) {
    %c0_i32 = arith.constant 0 : i32
    %c0_i32_0 = arith.constant 0 : i32
    %c0_i32_1 = arith.constant 0 : i32
    return %c0_i32, %c0_i32_0 : i32, i32
  }
  func.func @transform_5(%arg0: i32) -> (i32, i32) {
    %c0_i32 = arith.constant 0 : i32
    %c0_i32_0 = arith.constant 0 : i32
    %c0_i32_1 = arith.constant 0 : i32
    return %c0_i32, %c0_i32_0 : i32, i32
  }
  func.func @transform_6(%arg0: i32) -> (i32, i32) {
    %c0_i32 = arith.constant 0 : i32
    %c0_i32_0 = arith.constant 0 : i32
    %c0_i32_1 = arith.constant 0 : i32
    return %c0_i32, %c0_i32_0 : i32, i32
  }
  func.func @transform_7(%arg0: i32) -> (i32, i32) {
    %c0_i32 = arith.constant 0 : i32
    %c0_i32_0 = arith.constant 0 : i32
    %c0_i32_1 = arith.constant 0 : i32
    return %c0_i32, %c0_i32_0 : i32, i32
  }
  func.func @transform_8(%arg0: i32) -> (i32, i32) {
    %c0_i32 = arith.constant 0 : i32
    %c0_i32_0 = arith.constant 0 : i32
    %c0_i32_1 = arith.constant 0 : i32
    return %c0_i32, %c0_i32_0 : i32, i32
  }
  func.func @transform_9(%arg0: i32) -> (i32, i32) {
    %c0_i32 = arith.constant 0 : i32
    %c0_i32_0 = arith.constant 0 : i32
    %c0_i32_1 = arith.constant 0 : i32
    return %c0_i32, %c0_i32_0 : i32, i32
  }
  func.func @transform_10(%arg0: i32) -> (i32, i32) {
    %c0_i32 = arith.constant 0 : i32
    %c0_i32_0 = arith.constant 0 : i32
    %c0_i32_1 = arith.constant 0 : i32
    return %c0_i32, %c0_i32_0 : i32, i32
  }
  func.func @transform_11(%arg0: i32) -> (i32, i32) {
    %c0_i32 = arith.constant 0 : i32
    %c0_i32_0 = arith.constant 0 : i32
    %c0_i32_1 = arith.constant 0 : i32
    return %c0_i32, %c0_i32_0 : i32, i32
  }
  func.func @transform_12(%arg0: i32) -> (i32, i32) {
    %c0_i32 = arith.constant 0 : i32
    %c0_i32_0 = arith.constant 0 : i32
    %c0_i32_1 = arith.constant 0 : i32
    return %c0_i32, %c0_i32_0 : i32, i32
  }
  func.func @transform_13(%arg0: i32) -> (i32, i32) {
    %c0_i32 = arith.constant 0 : i32
    %c0_i32_0 = arith.constant 0 : i32
    %c0_i32_1 = arith.constant 0 : i32
    return %c0_i32, %c0_i32_0 : i32, i32
  }
  func.func @transform_14(%arg0: i32) -> (i32, i32) {
    %c0_i32 = arith.constant 0 : i32
    %c0_i32_0 = arith.constant 0 : i32
    %c0_i32_1 = arith.constant 0 : i32
    return %c0_i32, %c0_i32_0 : i32, i32
  }
}

module attributes {stable_mosaic.version = 11 : i64} {
  func.func @_layer_kernel(%arg0: i32, %arg1: memref<16x32xf32, #tpu.memory_space<vmem>>, %arg2: memref<2x8xf32, #tpu.memory_space<vmem>>, %arg3: memref<32x96xf32, #tpu.memory_space<vmem>>, %arg4: memref<1x96xf32, #tpu.memory_space<vmem>>, %arg5: memref<32x32xf32, #tpu.memory_space<vmem>>, %arg6: memref<1x32xf32, #tpu.memory_space<vmem>>, %arg7: memref<1x32xf32, #tpu.memory_space<vmem>>, %arg8: memref<1x32xf32, #tpu.memory_space<vmem>>, %arg9: memref<32x64xf32, #tpu.memory_space<vmem>>, %arg10: memref<1x64xf32, #tpu.memory_space<vmem>>, %arg11: memref<64x32xf32, #tpu.memory_space<vmem>>, %arg12: memref<1x32xf32, #tpu.memory_space<vmem>>, %arg13: memref<1x32xf32, #tpu.memory_space<vmem>>, %arg14: memref<1x32xf32, #tpu.memory_space<vmem>>, %arg15: memref<16x32xf32, #tpu.memory_space<vmem>>, %arg16: memref<16x32xf32, #tpu.memory_space<vmem>>) attributes {dimension_semantics = [#tpu.dimension_semantics<arbitrary>], iteration_bounds = array<i64: 1>, scalar_prefetch = 0 : i64, scratch_operands = 1 : i64, tpu.core_type = #tpu.core_type<tc>, window_params = [{pipeline_mode = #tpu.pipeline_mode<synchronous>, transform_indices = @transform_0, window_bounds = array<i64: 16, 32>}, {pipeline_mode = #tpu.pipeline_mode<synchronous>, transform_indices = @transform_1, window_bounds = array<i64: 2, 8>}, {pipeline_mode = #tpu.pipeline_mode<synchronous>, transform_indices = @transform_2, window_bounds = array<i64: 32, 96>}, {pipeline_mode = #tpu.pipeline_mode<synchronous>, transform_indices = @transform_3, window_bounds = array<i64: 1, 96>}, {pipeline_mode = #tpu.pipeline_mode<synchronous>, transform_indices = @transform_4, window_bounds = array<i64: 32, 32>}, {pipeline_mode = #tpu.pipeline_mode<synchronous>, transform_indices = @transform_5, window_bounds = array<i64: 1, 32>}, {pipeline_mode = #tpu.pipeline_mode<synchronous>, transform_indices = @transform_6, window_bounds = array<i64: 1, 32>}, {pipeline_mode = #tpu.pipeline_mode<synchronous>, transform_indices = @transform_7, window_bounds = array<i64: 1, 32>}, {pipeline_mode = #tpu.pipeline_mode<synchronous>, transform_indices = @transform_8, window_bounds = array<i64: 32, 64>}, {pipeline_mode = #tpu.pipeline_mode<synchronous>, transform_indices = @transform_9, window_bounds = array<i64: 1, 64>}, {pipeline_mode = #tpu.pipeline_mode<synchronous>, transform_indices = @transform_10, window_bounds = array<i64: 64, 32>}, {pipeline_mode = #tpu.pipeline_mode<synchronous>, transform_indices = @transform_11, window_bounds = array<i64: 1, 32>}, {pipeline_mode = #tpu.pipeline_mode<synchronous>, transform_indices = @transform_12, window_bounds = array<i64: 1, 32>}, {pipeline_mode = #tpu.pipeline_mode<synchronous>, transform_indices = @transform_13, window_bounds = array<i64: 1, 32>}, {pipeline_mode = #tpu.pipeline_mode<synchronous>, transform_indices = @transform_14, window_bounds = array<i64: 16, 32>}]} {
    %c0 = arith.constant 0 : index
    %c0_0 = arith.constant 0 : index
    %0 = vector.load %arg1[%c0, %c0_0] : memref<16x32xf32, #tpu.memory_space<vmem>>, vector<16x32xf32>
    %c0_1 = arith.constant 0 : index
    %c0_2 = arith.constant 0 : index
    %1 = vector.load %arg3[%c0_1, %c0_2] : memref<32x96xf32, #tpu.memory_space<vmem>>, vector<32x96xf32>
    %cst = arith.constant dense<0.000000e+00> : vector<16x96xf32>
    %2 = tpu.matmul %0, %1, %cst {dimension_numbers = #tpu.dot_dimension_numbers<[1], [0], [0], [1], [0, 0, 1, 1], [], []>} : vector<16x32xf32>, vector<32x96xf32>, vector<16x96xf32> -> vector<16x96xf32>
    %c0_3 = arith.constant 0 : index
    %c0_4 = arith.constant 0 : index
    %3 = vector.load %arg4[%c0_3, %c0_4] : memref<1x96xf32, #tpu.memory_space<vmem>>, vector<1x96xf32>
    %4 = vector.broadcast %3 : vector<1x96xf32> to vector<16x96xf32>
    %5 = arith.addf %2, %4 : vector<16x96xf32>
    %6 = vector.extract_strided_slice %5 {offsets = [0, 0], sizes = [16, 32], strides = [1, 1]} : vector<16x96xf32> to vector<16x32xf32>
    %7 = vector.extract_strided_slice %5 {offsets = [0, 32], sizes = [16, 32], strides = [1, 1]} : vector<16x96xf32> to vector<16x32xf32>
    %8 = vector.extract_strided_slice %5 {offsets = [0, 64], sizes = [16, 32], strides = [1, 1]} : vector<16x96xf32> to vector<16x32xf32>
    %c0_5 = arith.constant 0 : index
    %c0_6 = arith.constant 0 : index
    %9 = vector.load %arg2[%c0_5, %c0_6] : memref<2x8xf32, #tpu.memory_space<vmem>>, vector<2x8xf32>
    %10 = vector.extract_strided_slice %6 {offsets = [0, 0], sizes = [8, 32], strides = [1, 1]} : vector<16x32xf32> to vector<8x32xf32>
    %11 = vector.extract_strided_slice %7 {offsets = [0, 0], sizes = [8, 32], strides = [1, 1]} : vector<16x32xf32> to vector<8x32xf32>
    %12 = vector.extract_strided_slice %8 {offsets = [0, 0], sizes = [8, 32], strides = [1, 1]} : vector<16x32xf32> to vector<8x32xf32>
    %13 = vector.extract_strided_slice %9 {offsets = [0, 0], sizes = [1, 8], strides = [1, 1]} : vector<2x8xf32> to vector<1x8xf32>
    %14 = vector.extract_strided_slice %10 {offsets = [0, 0], sizes = [8, 16], strides = [1, 1]} : vector<8x32xf32> to vector<8x16xf32>
    %15 = vector.extract_strided_slice %11 {offsets = [0, 0], sizes = [8, 16], strides = [1, 1]} : vector<8x32xf32> to vector<8x16xf32>
    %16 = vector.extract_strided_slice %12 {offsets = [0, 0], sizes = [8, 16], strides = [1, 1]} : vector<8x32xf32> to vector<8x16xf32>
    %17 = tpu.transpose %15, [1, 0] : vector<8x16xf32> -> vector<16x8xf32>
    %cst_7 = arith.constant dense<0.000000e+00> : vector<8x8xf32>
    %18 = tpu.matmul %14, %17, %cst_7 {dimension_numbers = #tpu.dot_dimension_numbers<[1], [0], [0], [1], [0, 0, 1, 1], [], []>} : vector<8x16xf32>, vector<16x8xf32>, vector<8x8xf32> -> vector<8x8xf32>
    %cst_8 = arith.constant 2.500000e-01 : f32
    %19 = vector.broadcast %cst_8 : f32 to vector<8x8xf32>
    %20 = arith.mulf %18, %19 : vector<8x8xf32>
    %21 = vector.broadcast %13 : vector<1x8xf32> to vector<8x8xf32>
    %22 = arith.addf %20, %21 : vector<8x8xf32>
    %cst_9 = arith.constant dense<0xFF800000> : vector<8xf32>
    %23 = vector.multi_reduction <maximumf>, %22, %cst_9 [1] : vector<8x8xf32> to vector<8xf32>
    %24 = vector.shape_cast %23 : vector<8xf32> to vector<8x1xf32>
    %25 = vector.broadcast %24 : vector<8x1xf32> to vector<8x8xf32>
    %26 = arith.subf %22, %25 : vector<8x8xf32>
    %27 = math.exp %26 : vector<8x8xf32>
    %cst_10 = arith.constant dense<0.000000e+00> : vector<8xf32>
    %28 = vector.multi_reduction <add>, %27, %cst_10 [1] : vector<8x8xf32> to vector<8xf32>
    %29 = vector.shape_cast %28 : vector<8xf32> to vector<8x1xf32>
    %30 = tpu.reciprocal %29 {approx = true} : vector<8x1xf32> -> vector<8x1xf32>
    %31 = vector.broadcast %30 : vector<8x1xf32> to vector<8x8xf32>
    %32 = arith.mulf %27, %31 : vector<8x8xf32>
    %cst_11 = arith.constant dense<0.000000e+00> : vector<8x16xf32>
    %33 = tpu.matmul %32, %16, %cst_11 {dimension_numbers = #tpu.dot_dimension_numbers<[1], [0], [0], [1], [0, 0, 1, 1], [], []>} : vector<8x8xf32>, vector<8x16xf32>, vector<8x16xf32> -> vector<8x16xf32>
    %c0_12 = arith.constant 0 : index
    %c0_13 = arith.constant 0 : index
    %34 = vector.load %arg16[%c0_12, %c0_13] : memref<16x32xf32, #tpu.memory_space<vmem>>, vector<8x16xf32>
    tpu.vector_store %arg16[%c0_12, %c0_13], %33 {strides = array<i32>} : memref<16x32xf32, #tpu.memory_space<vmem>>, vector<8x16xf32>,
    %35 = vector.extract_strided_slice %10 {offsets = [0, 16], sizes = [8, 16], strides = [1, 1]} : vector<8x32xf32> to vector<8x16xf32>
    %36 = vector.extract_strided_slice %11 {offsets = [0, 16], sizes = [8, 16], strides = [1, 1]} : vector<8x32xf32> to vector<8x16xf32>
    %37 = vector.extract_strided_slice %12 {offsets = [0, 16], sizes = [8, 16], strides = [1, 1]} : vector<8x32xf32> to vector<8x16xf32>
    %38 = tpu.transpose %36, [1, 0] : vector<8x16xf32> -> vector<16x8xf32>
    %cst_14 = arith.constant dense<0.000000e+00> : vector<8x8xf32>
    %39 = tpu.matmul %35, %38, %cst_14 {dimension_numbers = #tpu.dot_dimension_numbers<[1], [0], [0], [1], [0, 0, 1, 1], [], []>} : vector<8x16xf32>, vector<16x8xf32>, vector<8x8xf32> -> vector<8x8xf32>
    %cst_15 = arith.constant 2.500000e-01 : f32
    %40 = vector.broadcast %cst_15 : f32 to vector<8x8xf32>
    %41 = arith.mulf %39, %40 : vector<8x8xf32>
    %42 = vector.broadcast %13 : vector<1x8xf32> to vector<8x8xf32>
    %43 = arith.addf %41, %42 : vector<8x8xf32>
    %cst_16 = arith.constant dense<0xFF800000> : vector<8xf32>
    %44 = vector.multi_reduction <maximumf>, %43, %cst_16 [1] : vector<8x8xf32> to vector<8xf32>
    %45 = vector.shape_cast %44 : vector<8xf32> to vector<8x1xf32>
    %46 = vector.broadcast %45 : vector<8x1xf32> to vector<8x8xf32>
    %47 = arith.subf %43, %46 : vector<8x8xf32>
    %48 = math.exp %47 : vector<8x8xf32>
    %cst_17 = arith.constant dense<0.000000e+00> : vector<8xf32>
    %49 = vector.multi_reduction <add>, %48, %cst_17 [1] : vector<8x8xf32> to vector<8xf32>
    %50 = vector.shape_cast %49 : vector<8xf32> to vector<8x1xf32>
    %51 = tpu.reciprocal %50 {approx = true} : vector<8x1xf32> -> vector<8x1xf32>
    %52 = vector.broadcast %51 : vector<8x1xf32> to vector<8x8xf32>
    %53 = arith.mulf %48, %52 : vector<8x8xf32>
    %cst_18 = arith.constant dense<0.000000e+00> : vector<8x16xf32>
    %54 = tpu.matmul %53, %37, %cst_18 {dimension_numbers = #tpu.dot_dimension_numbers<[1], [0], [0], [1], [0, 0, 1, 1], [], []>} : vector<8x8xf32>, vector<8x16xf32>, vector<8x16xf32> -> vector<8x16xf32>
    %c0_19 = arith.constant 0 : index
    %c16 = arith.constant 16 : index
    %55 = vector.load %arg16[%c0_19, %c16] : memref<16x32xf32, #tpu.memory_space<vmem>>, vector<8x16xf32>
    tpu.vector_store %arg16[%c0_19, %c16], %54 {strides = array<i32>} : memref<16x32xf32, #tpu.memory_space<vmem>>, vector<8x16xf32>,
    %56 = vector.extract_strided_slice %6 {offsets = [8, 0], sizes = [8, 32], strides = [1, 1]} : vector<16x32xf32> to vector<8x32xf32>
    %57 = vector.extract_strided_slice %7 {offsets = [8, 0], sizes = [8, 32], strides = [1, 1]} : vector<16x32xf32> to vector<8x32xf32>
    %58 = vector.extract_strided_slice %8 {offsets = [8, 0], sizes = [8, 32], strides = [1, 1]} : vector<16x32xf32> to vector<8x32xf32>
    %59 = vector.extract_strided_slice %9 {offsets = [1, 0], sizes = [1, 8], strides = [1, 1]} : vector<2x8xf32> to vector<1x8xf32>
    %60 = vector.extract_strided_slice %56 {offsets = [0, 0], sizes = [8, 16], strides = [1, 1]} : vector<8x32xf32> to vector<8x16xf32>
    %61 = vector.extract_strided_slice %57 {offsets = [0, 0], sizes = [8, 16], strides = [1, 1]} : vector<8x32xf32> to vector<8x16xf32>
    %62 = vector.extract_strided_slice %58 {offsets = [0, 0], sizes = [8, 16], strides = [1, 1]} : vector<8x32xf32> to vector<8x16xf32>
    %63 = tpu.transpose %61, [1, 0] : vector<8x16xf32> -> vector<16x8xf32>
    %cst_20 = arith.constant dense<0.000000e+00> : vector<8x8xf32>
    %64 = tpu.matmul %60, %63, %cst_20 {dimension_numbers = #tpu.dot_dimension_numbers<[1], [0], [0], [1], [0, 0, 1, 1], [], []>} : vector<8x16xf32>, vector<16x8xf32>, vector<8x8xf32> -> vector<8x8xf32>
    %cst_21 = arith.constant 2.500000e-01 : f32
    %65 = vector.broadcast %cst_21 : f32 to vector<8x8xf32>
    %66 = arith.mulf %64, %65 : vector<8x8xf32>
    %67 = vector.broadcast %59 : vector<1x8xf32> to vector<8x8xf32>
    %68 = arith.addf %66, %67 : vector<8x8xf32>
    %cst_22 = arith.constant dense<0xFF800000> : vector<8xf32>
    %69 = vector.multi_reduction <maximumf>, %68, %cst_22 [1] : vector<8x8xf32> to vector<8xf32>
    %70 = vector.shape_cast %69 : vector<8xf32> to vector<8x1xf32>
    %71 = vector.broadcast %70 : vector<8x1xf32> to vector<8x8xf32>
    %72 = arith.subf %68, %71 : vector<8x8xf32>
    %73 = math.exp %72 : vector<8x8xf32>
    %cst_23 = arith.constant dense<0.000000e+00> : vector<8xf32>
    %74 = vector.multi_reduction <add>, %73, %cst_23 [1] : vector<8x8xf32> to vector<8xf32>
    %75 = vector.shape_cast %74 : vector<8xf32> to vector<8x1xf32>
    %76 = tpu.reciprocal %75 {approx = true} : vector<8x1xf32> -> vector<8x1xf32>
    %77 = vector.broadcast %76 : vector<8x1xf32> to vector<8x8xf32>
    %78 = arith.mulf %73, %77 : vector<8x8xf32>
    %cst_24 = arith.constant dense<0.000000e+00> : vector<8x16xf32>
    %79 = tpu.matmul %78, %62, %cst_24 {dimension_numbers = #tpu.dot_dimension_numbers<[1], [0], [0], [1], [0, 0, 1, 1], [], []>} : vector<8x8xf32>, vector<8x16xf32>, vector<8x16xf32> -> vector<8x16xf32>
    %c8 = arith.constant 8 : index
    %c0_25 = arith.constant 0 : index
    %80 = vector.load %arg16[%c8, %c0_25] : memref<16x32xf32, #tpu.memory_space<vmem>>, vector<8x16xf32>
    tpu.vector_store %arg16[%c8, %c0_25], %79 {strides = array<i32>} : memref<16x32xf32, #tpu.memory_space<vmem>>, vector<8x16xf32>,
    %81 = vector.extract_strided_slice %56 {offsets = [0, 16], sizes = [8, 16], strides = [1, 1]} : vector<8x32xf32> to vector<8x16xf32>
    %82 = vector.extract_strided_slice %57 {offsets = [0, 16], sizes = [8, 16], strides = [1, 1]} : vector<8x32xf32> to vector<8x16xf32>
    %83 = vector.extract_strided_slice %58 {offsets = [0, 16], sizes = [8, 16], strides = [1, 1]} : vector<8x32xf32> to vector<8x16xf32>
    %84 = tpu.transpose %82, [1, 0] : vector<8x16xf32> -> vector<16x8xf32>
    %cst_26 = arith.constant dense<0.000000e+00> : vector<8x8xf32>
    %85 = tpu.matmul %81, %84, %cst_26 {dimension_numbers = #tpu.dot_dimension_numbers<[1], [0], [0], [1], [0, 0, 1, 1], [], []>} : vector<8x16xf32>, vector<16x8xf32>, vector<8x8xf32> -> vector<8x8xf32>
    %cst_27 = arith.constant 2.500000e-01 : f32
    %86 = vector.broadcast %cst_27 : f32 to vector<8x8xf32>
    %87 = arith.mulf %85, %86 : vector<8x8xf32>
    %88 = vector.broadcast %59 : vector<1x8xf32> to vector<8x8xf32>
    %89 = arith.addf %87, %88 : vector<8x8xf32>
    %cst_28 = arith.constant dense<0xFF800000> : vector<8xf32>
    %90 = vector.multi_reduction <maximumf>, %89, %cst_28 [1] : vector<8x8xf32> to vector<8xf32>
    %91 = vector.shape_cast %90 : vector<8xf32> to vector<8x1xf32>
    %92 = vector.broadcast %91 : vector<8x1xf32> to vector<8x8xf32>
    %93 = arith.subf %89, %92 : vector<8x8xf32>
    %94 = math.exp %93 : vector<8x8xf32>
    %cst_29 = arith.constant dense<0.000000e+00> : vector<8xf32>
    %95 = vector.multi_reduction <add>, %94, %cst_29 [1] : vector<8x8xf32> to vector<8xf32>
    %96 = vector.shape_cast %95 : vector<8xf32> to vector<8x1xf32>
    %97 = tpu.reciprocal %96 {approx = true} : vector<8x1xf32> -> vector<8x1xf32>
    %98 = vector.broadcast %97 : vector<8x1xf32> to vector<8x8xf32>
    %99 = arith.mulf %94, %98 : vector<8x8xf32>
    %cst_30 = arith.constant dense<0.000000e+00> : vector<8x16xf32>
    %100 = tpu.matmul %99, %83, %cst_30 {dimension_numbers = #tpu.dot_dimension_numbers<[1], [0], [0], [1], [0, 0, 1, 1], [], []>} : vector<8x8xf32>, vector<8x16xf32>, vector<8x16xf32> -> vector<8x16xf32>
    %c8_31 = arith.constant 8 : index
    %c16_32 = arith.constant 16 : index
    %101 = vector.load %arg16[%c8_31, %c16_32] : memref<16x32xf32, #tpu.memory_space<vmem>>, vector<8x16xf32>
    tpu.vector_store %arg16[%c8_31, %c16_32], %100 {strides = array<i32>} : memref<16x32xf32, #tpu.memory_space<vmem>>, vector<8x16xf32>,
    %c0_33 = arith.constant 0 : index
    %c0_34 = arith.constant 0 : index
    %102 = vector.load %arg16[%c0_33, %c0_34] : memref<16x32xf32, #tpu.memory_space<vmem>>, vector<16x32xf32>
    %c0_35 = arith.constant 0 : index
    %c0_36 = arith.constant 0 : index
    %103 = vector.load %arg5[%c0_35, %c0_36] : memref<32x32xf32, #tpu.memory_space<vmem>>, vector<32x32xf32>
    %cst_37 = arith.constant dense<0.000000e+00> : vector<16x32xf32>
    %104 = tpu.matmul %102, %103, %cst_37 {dimension_numbers = #tpu.dot_dimension_numbers<[1], [0], [0], [1], [0, 0, 1, 1], [], []>} : vector<16x32xf32>, vector<32x32xf32>, vector<16x32xf32> -> vector<16x32xf32>
    %c0_38 = arith.constant 0 : index
    %c0_39 = arith.constant 0 : index
    %105 = vector.load %arg6[%c0_38, %c0_39] : memref<1x32xf32, #tpu.memory_space<vmem>>, vector<1x32xf32>
    %106 = vector.broadcast %105 : vector<1x32xf32> to vector<16x32xf32>
    %107 = arith.addf %104, %106 : vector<16x32xf32>
    %108 = arith.addf %107, %0 : vector<16x32xf32>
    %c0_40 = arith.constant 0 : index
    %c0_41 = arith.constant 0 : index
    %109 = vector.load %arg7[%c0_40, %c0_41] : memref<1x32xf32, #tpu.memory_space<vmem>>, vector<1x32xf32>
    %c0_42 = arith.constant 0 : index
    %c0_43 = arith.constant 0 : index
    %110 = vector.load %arg8[%c0_42, %c0_43] : memref<1x32xf32, #tpu.memory_space<vmem>>, vector<1x32xf32>
    %cst_44 = arith.constant dense<0.000000e+00> : vector<16xf32>
    %111 = vector.multi_reduction <add>, %108, %cst_44 [1] : vector<16x32xf32> to vector<16xf32>
    %112 = vector.shape_cast %111 : vector<16xf32> to vector<16x1xf32>
    %cst_45 = arith.constant 3.200000e+01 : f32
    %113 = vector.broadcast %cst_45 : f32 to vector<16x1xf32>
    %114 = arith.divf %112, %113 : vector<16x1xf32>
    %115 = vector.broadcast %114 : vector<16x1xf32> to vector<16x32xf32>
    %116 = arith.subf %108, %115 : vector<16x32xf32>
    %117 = arith.mulf %116, %116 : vector<16x32xf32>
    %cst_46 = arith.constant dense<0.000000e+00> : vector<16xf32>
    %118 = vector.multi_reduction <add>, %117, %cst_46 [1] : vector<16x32xf32> to vector<16xf32>
    %119 = vector.shape_cast %118 : vector<16xf32> to vector<16x1xf32>
    %cst_47 = arith.constant 3.200000e+01 : f32
    %120 = vector.broadcast %cst_47 : f32 to vector<16x1xf32>
    %121 = arith.divf %119, %120 : vector<16x1xf32>
    %122 = vector.broadcast %114 : vector<16x1xf32> to vector<16x32xf32>
    %123 = arith.subf %108, %122 : vector<16x32xf32>
    %cst_48 = arith.constant 9.99999974E-6 : f32
    %124 = vector.broadcast %cst_48 : f32 to vector<16x1xf32>
    %125 = arith.addf %121, %124 : vector<16x1xf32>
    %126 = math.rsqrt %125 : vector<16x1xf32>
    %127 = vector.broadcast %126 : vector<16x1xf32> to vector<16x32xf32>
    %128 = arith.mulf %123, %127 : vector<16x32xf32>
    %129 = vector.broadcast %109 : vector<1x32xf32> to vector<16x32xf32>
    %130 = arith.mulf %128, %129 : vector<16x32xf32>
    %131 = vector.broadcast %110 : vector<1x32xf32> to vector<16x32xf32>
    %132 = arith.addf %130, %131 : vector<16x32xf32>
    %c0_49 = arith.constant 0 : index
    %c0_50 = arith.constant 0 : index
    %133 = vector.load %arg9[%c0_49, %c0_50] : memref<32x64xf32, #tpu.memory_space<vmem>>, vector<32x64xf32>
    %cst_51 = arith.constant dense<0.000000e+00> : vector<16x64xf32>
    %134 = tpu.matmul %132, %133, %cst_51 {dimension_numbers = #tpu.dot_dimension_numbers<[1], [0], [0], [1], [0, 0, 1, 1], [], []>} : vector<16x32xf32>, vector<32x64xf32>, vector<16x64xf32> -> vector<16x64xf32>
    %c0_52 = arith.constant 0 : index
    %c0_53 = arith.constant 0 : index
    %135 = vector.load %arg10[%c0_52, %c0_53] : memref<1x64xf32, #tpu.memory_space<vmem>>, vector<1x64xf32>
    %136 = vector.broadcast %135 : vector<1x64xf32> to vector<16x64xf32>
    %137 = arith.addf %134, %136 : vector<16x64xf32>
    %cst_54 = arith.constant 5.000000e-01 : f32
    %138 = vector.broadcast %cst_54 : f32 to vector<16x64xf32>
    %139 = arith.mulf %138, %137 : vector<16x64xf32>
    %cst_55 = arith.constant 4.471500e-02 : f32
    %140 = vector.broadcast %cst_55 : f32 to vector<16x64xf32>
    %141 = arith.mulf %140, %137 : vector<16x64xf32>
    %142 = arith.mulf %141, %137 : vector<16x64xf32>
    %143 = arith.mulf %142, %137 : vector<16x64xf32>
    %144 = arith.addf %137, %143 : vector<16x64xf32>
    %cst_56 = arith.constant 0.797884583 : f32
    %145 = vector.broadcast %cst_56 : f32 to vector<16x64xf32>
    %146 = arith.mulf %145, %144 : vector<16x64xf32>
    %147 = math.tanh %146 : vector<16x64xf32>
    %cst_57 = arith.constant 1.000000e+00 : f32
    %148 = vector.broadcast %cst_57 : f32 to vector<16x64xf32>
    %149 = arith.addf %148, %147 : vector<16x64xf32>
    %150 = arith.mulf %139, %149 : vector<16x64xf32>
    %c0_58 = arith.constant 0 : index
    %c0_59 = arith.constant 0 : index
    %151 = vector.load %arg11[%c0_58, %c0_59] : memref<64x32xf32, #tpu.memory_space<vmem>>, vector<64x32xf32>
    %cst_60 = arith.constant dense<0.000000e+00> : vector<16x32xf32>
    %152 = tpu.matmul %150, %151, %cst_60 {dimension_numbers = #tpu.dot_dimension_numbers<[1], [0], [0], [1], [0, 0, 1, 1], [], []>} : vector<16x64xf32>, vector<64x32xf32>, vector<16x32xf32> -> vector<16x32xf32>
    %c0_61 = arith.constant 0 : index
    %c0_62 = arith.constant 0 : index
    %153 = vector.load %arg12[%c0_61, %c0_62] : memref<1x32xf32, #tpu.memory_space<vmem>>, vector<1x32xf32>
    %154 = vector.broadcast %153 : vector<1x32xf32> to vector<16x32xf32>
    %155 = arith.addf %152, %154 : vector<16x32xf32>
    %156 = arith.addf %155, %132 : vector<16x32xf32>
    %c0_63 = arith.constant 0 : index
    %c0_64 = arith.constant 0 : index
    %157 = vector.load %arg13[%c0_63, %c0_64] : memref<1x32xf32, #tpu.memory_space<vmem>>, vector<1x32xf32>
    %c0_65 = arith.constant 0 : index
    %c0_66 = arith.constant 0 : index
    %158 = vector.load %arg14[%c0_65, %c0_66] : memref<1x32xf32, #tpu.memory_space<vmem>>, vector<1x32xf32>
    %cst_67 = arith.constant dense<0.000000e+00> : vector<16xf32>
    %159 = vector.multi_reduction <add>, %156, %cst_67 [1] : vector<16x32xf32> to vector<16xf32>
    %160 = vector.shape_cast %159 : vector<16xf32> to vector<16x1xf32>
    %cst_68 = arith.constant 3.200000e+01 : f32
    %161 = vector.broadcast %cst_68 : f32 to vector<16x1xf32>
    %162 = arith.divf %160, %161 : vector<16x1xf32>
    %163 = vector.broadcast %162 : vector<16x1xf32> to vector<16x32xf32>
    %164 = arith.subf %156, %163 : vector<16x32xf32>
    %165 = arith.mulf %164, %164 : vector<16x32xf32>
    %cst_69 = arith.constant dense<0.000000e+00> : vector<16xf32>
    %166 = vector.multi_reduction <add>, %165, %cst_69 [1] : vector<16x32xf32> to vector<16xf32>
    %167 = vector.shape_cast %166 : vector<16xf32> to vector<16x1xf32>
    %cst_70 = arith.constant 3.200000e+01 : f32
    %168 = vector.broadcast %cst_70 : f32 to vector<16x1xf32>
    %169 = arith.divf %167, %168 : vector<16x1xf32>
    %170 = vector.broadcast %162 : vector<16x1xf32> to vector<16x32xf32>
    %171 = arith.subf %156, %170 : vector<16x32xf32>
    %cst_71 = arith.constant 9.99999974E-6 : f32
    %172 = vector.broadcast %cst_71 : f32 to vector<16x1xf32>
    %173 = arith.addf %169, %172 : vector<16x1xf32>
    %174 = math.rsqrt %173 : vector<16x1xf32>
    %175 = vector.broadcast %174 : vector<16x1xf32> to vector<16x32xf32>
    %176 = arith.mulf %171, %175 : vector<16x32xf32>
    %177 = vector.broadcast %157 : vector<1x32xf32> to vector<16x32xf32>
    %178 = arith.mulf %176, %177 : vector<16x32xf32>
    %179 = vector.broadcast %158 : vector<1x32xf32> to vector<16x32xf32>
    %180 = arith.addf %178, %179 : vector<16x32xf32>
    %c0_72 = arith.constant 0 : index
    %c0_73 = arith.constant 0 : index
    %181 = vector.load %arg15[%c0_72, %c0_73] : memref<16x32xf32, #tpu.memory_space<vmem>>, vector<16x32xf32>
    tpu.vector_store %arg15[%c0_72, %c0_73], %180 {strides = array<i32>} : memref<16x32xf32, #tpu.memory_space<vmem>>, vector<16x32xf32>,
    return
  }
  func.func @transform_0(%arg0: i32) -> (i32, i32) {
    %c0_i32 = arith.constant 0 : i32
    %c0_i32_0 = arith.constant 0 : i32
    %c0_i32_1 = arith.constant 0 : i32
    return %c0_i32, %c0_i32_0 : i32, i32
  }
  func.func @transform_1(%arg0: i32) -> (i32, i32) {
    %c0_i32 = arith.constant 0 : i32
    %c0_i32_0 = arith.constant 0 : i32
    %c0_i32_1 = arith.constant 0 : i32
    return %c0_i32, %c0_i32_0 : i32, i32
  }
  func.func @transform_2(%arg0: i32) -> (i32, i32) {
    %c0_i32 = arith.constant 0 : i32
    %c0_i32_0 = arith.constant 0 : i32
    %c0_i32_1 = arith.constant 0 : i32
    return %c0_i32, %c0_i32_0 : i32, i32
  }
  func.func @transform_3(%arg0: i32) -> (i32, i32) {
    %c0_i32 = arith.constant 0 : i32
    %c0_i32_0 = arith.constant 0 : i32
    %c0_i32_1 = arith.constant 0 : i32
    return %c0_i32, %c0_i32_0 : i32, i32
  }
  func.func @transform_4(%arg0: i32) -> (i32, i32) {
    %c0_i32 = arith.constant 0 : i32
    %c0_i32_0 = arith.constant 0 : i32
    %c0_i32_1 = arith.constant 0 : i32
    return %c0_i32, %c0_i32_0 : i32, i32
  }
  func.func @transform_5(%arg0: i32) -> (i32, i32) {
    %c0_i32 = arith.constant 0 : i32
    %c0_i32_0 = arith.constant 0 : i32
    %c0_i32_1 = arith.constant 0 : i32
    return %c0_i32, %c0_i32_0 : i32, i32
  }
  func.func @transform_6(%arg0: i32) -> (i32, i32) {
    %c0_i32 = arith.constant 0 : i32
    %c0_i32_0 = arith.constant 0 : i32
    %c0_i32_1 = arith.constant 0 : i32
    return %c0_i32, %c0_i32_0 : i32, i32
  }
  func.func @transform_7(%arg0: i32) -> (i32, i32) {
    %c0_i32 = arith.constant 0 : i32
    %c0_i32_0 = arith.constant 0 : i32
    %c0_i32_1 = arith.constant 0 : i32
    return %c0_i32, %c0_i32_0 : i32, i32
  }
  func.func @transform_8(%arg0: i32) -> (i32, i32) {
    %c0_i32 = arith.constant 0 : i32
    %c0_i32_0 = arith.constant 0 : i32
    %c0_i32_1 = arith.constant 0 : i32
    return %c0_i32, %c0_i32_0 : i32, i32
  }
  func.func @transform_9(%arg0: i32) -> (i32, i32) {
    %c0_i32 = arith.constant 0 : i32
    %c0_i32_0 = arith.constant 0 : i32
    %c0_i32_1 = arith.constant 0 : i32
    return %c0_i32, %c0_i32_0 : i32, i32
  }
  func.func @transform_10(%arg0: i32) -> (i32, i32) {
    %c0_i32 = arith.constant 0 : i32
    %c0_i32_0 = arith.constant 0 : i32
    %c0_i32_1 = arith.constant 0 : i32
    return %c0_i32, %c0_i32_0 : i32, i32
  }
  func.func @transform_11(%arg0: i32) -> (i32, i32) {
    %c0_i32 = arith.constant 0 : i32
    %c0_i32_0 = arith.constant 0 : i32
    %c0_i32_1 = arith.constant 0 : i32
    return %c0_i32, %c0_i32_0 : i32, i32
  }
  func.func @transform_12(%arg0: i32) -> (i32, i32) {
    %c0_i32 = arith.constant 0 : i32
    %c0_i32_0 = arith.constant 0 : i32
    %c0_i32_1 = arith.constant 0 : i32
    return %c0_i32, %c0_i32_0 : i32, i32
  }
  func.func @transform_13(%arg0: i32) -> (i32, i32) {
    %c0_i32 = arith.constant 0 : i32
    %c0_i32_0 = arith.constant 0 : i32
    %c0_i32_1 = arith.constant 0 : i32
    return %c0_i32, %c0_i32_0 : i32, i32
  }
  func.func @transform_14(%arg0: i32) -> (i32, i32) {
    %c0_i32 = arith.constant 0 : i32
    %c0_i32_0 = arith.constant 0 : i32
    %c0_i32_1 = arith.constant 0 : i32
    return %c0_i32, %c0_i32_0 : i32, i32
  }
}

</mosaic_0001>

<llo_original>
// kernel: roberta_encoder.3
$region0: #{roberta_encoder.3}
  #allocation0 [shape = 'u32[]', space=smem, size = 0x4, offset = 0x4, fixed_abs, tag = 'smem constant byte address 0x4 - core index']
  #allocation1 [shape = 'u32[72,128]{1,0:T(1,128)}', space=vmem, size = 0x9000, scoped, tag = 'internal scratch']
  %s0 = inlined_call_operand.vmem [shape: f32[16,32], index: 0, kind: input, shape index: {}]
  %s1 = inlined_call_operand.vmem [shape: f32[16,32], index: 1, kind: input, shape index: {}]
  %s2 = inlined_call_operand.vmem [shape: f32[16,32], index: 2, kind: input, shape index: {}]
  %s3 = inlined_call_operand.vmem [shape: f32[1,32], index: 3, kind: input, shape index: {}]
  %s4 = inlined_call_operand.vmem [shape: f32[1,32], index: 4, kind: input, shape index: {}]
  %s5 = inlined_call_operand.vmem [shape: f32[16,32], index: 5, kind: output, shape index: {}]
  %s6 = sld [smem:[#allocation0]]
  $region30: #{roberta_encoder.3} parent=0
    _
  %s8 = ssub.s32 1, %s6
  %s9 = scalar_select 0, %s8, %s6
  // Predicated region
  $region2: #{roberta_encoder.3} parent=0 // pred_check
    _
  $region3: #{roberta_encoder.3} parent=0 // pred_check_branch
    %11 = sbr.rel (0) target = $region5
  $region4: #{roberta_encoder.3} parent=0 // pred_region
    _
  $region5: #{roberta_encoder.3} parent=0 // pred_fallthru
    _
  // Predicated region
  $region6: #{roberta_encoder.3} parent=0 // pred_check
    _
  $region7: #{roberta_encoder.3} parent=0 // pred_check_branch
    %13 = sbr.rel (0) target = $region9
  $region8: #{roberta_encoder.3} parent=0 // pred_region
    _
  $region9: #{roberta_encoder.3} parent=0 // pred_fallthru
    _
  // Predicated region
  $region10: #{roberta_encoder.3} parent=0 // pred_check
    _
  $region11: #{roberta_encoder.3} parent=0 // pred_check_branch
    %15 = sbr.rel (0) target = $region13
  $region12: #{roberta_encoder.3} parent=0 // pred_region
    _
  $region13: #{roberta_encoder.3} parent=0 // pred_fallthru
    _
  // Predicated region
  $region14: #{roberta_encoder.3} parent=0 // pred_check
    _
  $region15: #{roberta_encoder.3} parent=0 // pred_check_branch
    %17 = sbr.rel (0) target = $region17
  $region16: #{roberta_encoder.3} parent=0 // pred_region
    _
  $region17: #{roberta_encoder.3} parent=0 // pred_fallthru
    _
  // Predicated region
  $region18: #{roberta_encoder.3} parent=0 // pred_check
    _
  $region19: #{roberta_encoder.3} parent=0 // pred_check_branch
    %19 = sbr.rel (0) target = $region21
  $region20: #{roberta_encoder.3} parent=0 // pred_region
    _
  $region21: #{roberta_encoder.3} parent=0 // pred_fallthru
    _
  %v20 = vld [vmem:[%s0] sm:$0xff]
  %v21 = vld [vmem:[%s0 + $0x8] sm:$0xff]
  %v22 = vld [vmem:[%s1] sm:$0xff]
  %v23 = vld [vmem:[%s1 + $0x8] sm:$0xff]
  %v24 = vadd.f32 %v20, %v22
  %v25 = vadd.f32 %v21, %v23
  %v26 = vld [vmem:[%s2] sm:$0xff]
  %v27 = vld [vmem:[%s2 + $0x8] sm:$0xff]
  %v28 = vadd.f32 %v24, %v26
  %v29 = vadd.f32 %v25, %v27
  %v30 = vld [vmem:[%s3] sm:$0x1]
  %v31 = vld [vmem:[%s4] sm:$0x1]
  %vm32 = vcmask 261120
  %v33 = vsel %vm32, %v28, 0.0
  %34 = vadd.xlane.f32.xlu0 %v33
  %v35 = vpop.xlane.xlu0 %34
  %v36 = vsel %vm32, %v29, 0.0
  %37 = vadd.xlane.f32.xlu0 %v36
  %v38 = vpop.xlane.xlu0 %37
  %v39 = vrcp.pop 32.0
  %v40 = vmul.f32 32.0, %v39
  %v41 = vsub.f32 1.0, %v40
  %v42 = vmul.f32 %v39, %v41
  %v43 = vadd.f32 %v39, %v42
  %vm44 = vweird.f32 %v39
  %v45 = vsel %vm44, %v39, %v43
  %v46 = vmul.f32 %v35, %v45
  %v47 = vmul.f32 %v38, %v45
  %v48 = vsub.f32 %v28, %v46
  %v49 = vsub.f32 %v29, %v47
  %v50 = vmul.f32 %v48, %v48
  %v51 = vmul.f32 %v49, %v49
  %v52 = vsel %vm32, %v50, 0.0
  %53 = vadd.xlane.f32.xlu0 %v52
  %v54 = vpop.xlane.xlu0 %53
  %v55 = vsel %vm32, %v51, 0.0
  %56 = vadd.xlane.f32.xlu0 %v55
  %v57 = vpop.xlane.xlu0 %56
  %v58 = vmul.f32 %v54, %v45
  %v59 = vmul.f32 %v57, %v45
  %v60 = vadd.f32 %v58, 1e-05
  %v61 = vadd.f32 %v59, 1e-05
  %v62 = vrsqrt.pop %v60
  %v63 = vmul.f32 %v62, %v60
  %v64 = vmul.f32 %v63, %v62
  %v65 = vmul.f32 0.5, %v64
  %v66 = vsub.f32 1.5, %v65
  %v67 = vmul.f32 %v62, %v66
  %vm68 = vweird.f32 %v60
  %vm69 = vweird.f32 %v62
  %vm70 = vmor %vm68, %vm69
  %v71 = vsel %vm70, %v62, %v67
  %v72 = vrsqrt.pop %v61
  %v73 = vmul.f32 %v72, %v61
  %v74 = vmul.f32 %v73, %v72
  %v75 = vmul.f32 0.5, %v74
  %v76 = vsub.f32 1.5, %v75
  %v77 = vmul.f32 %v72, %v76
  %vm78 = vweird.f32 %v61
  %vm79 = vweird.f32 %v72
  %vm80 = vmor %vm78, %vm79
  %v81 = vsel %vm80, %v72, %v77
  %v82 = vmul.f32 %v48, %v71
  %v83 = vmul.f32 %v49, %v81
  %v85 = vperm.slane %v30, 0
  %v87 = vmul.f32 %v82, %v85
  %v88 = vmul.f32 %v83, %v85
  %v90 = vperm.slane %v31, 0
  %v92 = vadd.f32 %v87, %v90
  %v93 = vadd.f32 %v88, %v90
  %94 = vst.msk [vmem:[%s5] sm:$0xff] %vm32, %v92
  %95 = vst.msk [vmem:[%s5 + $0x8] sm:$0xff] %vm32, %v93
  // Predicated region
  $region22: #{roberta_encoder.3} parent=0 // pred_check
    _
  $region23: #{roberta_encoder.3} parent=0 // pred_check_branch
    %97 = sbr.rel (0) target = $region25
  $region24: #{roberta_encoder.3} parent=0 // pred_region
    _
  $region25: #{roberta_encoder.3} parent=0 // pred_fallthru
    _
  // Predicated region
  $region26: #{roberta_encoder.3} parent=0 // pred_check
    _
  $region27: #{roberta_encoder.3} parent=0 // pred_check_branch
    %99 = sbr.rel (0) target = $region29
  $region28: #{roberta_encoder.3} parent=0 // pred_region
    _
  $region29: #{roberta_encoder.3} parent=0 // pred_fallthru
    _

// kernel: roberta_encoder.4
$region0: #{roberta_encoder.4}
  #allocation0 [shape = 'u32[]', space=smem, size = 0x4, offset = 0x4, fixed_abs, tag = 'smem constant byte address 0x4 - core index']
  #allocation1 [shape = 'u32[72,128]{1,0:T(1,128)}', space=vmem, size = 0x9000, scoped, tag = 'internal scratch']
  #allocation2 [shape = 'f32[16,32]{1,0:T(8,128)}', space=vmem, size = 0x2000, scoped, tag = 'scratch operand']
  %s0 = inlined_call_operand.vmem [shape: f32[16,32], index: 0, kind: input, shape index: {}]
  %s1 = inlined_call_operand.vmem [shape: f32[2,8], index: 1, kind: input, shape index: {}]
  %s2 = inlined_call_operand.vmem [shape: f32[32,96], index: 2, kind: input, shape index: {}]
  %s3 = inlined_call_operand.vmem [shape: f32[1,96], index: 3, kind: input, shape index: {}]
  %s4 = inlined_call_operand.vmem [shape: f32[32,32], index: 4, kind: input, shape index: {}]
  %s5 = inlined_call_operand.vmem [shape: f32[1,32], index: 5, kind: input, shape index: {}]
  %s6 = inlined_call_operand.vmem [shape: f32[1,32], index: 6, kind: input, shape index: {}]
  %s7 = inlined_call_operand.vmem [shape: f32[1,32], index: 7, kind: input, shape index: {}]
  %s8 = inlined_call_operand.vmem [shape: f32[32,64], index: 8, kind: input, shape index: {}]
  %s9 = inlined_call_operand.vmem [shape: f32[1,64], index: 9, kind: input, shape index: {}]
  %s10 = inlined_call_operand.vmem [shape: f32[64,32], index: 10, kind: input, shape index: {}]
  %s11 = inlined_call_operand.vmem [shape: f32[1,32], index: 11, kind: input, shape index: {}]
  %s12 = inlined_call_operand.vmem [shape: f32[1,32], index: 12, kind: input, shape index: {}]
  %s13 = inlined_call_operand.vmem [shape: f32[1,32], index: 13, kind: input, shape index: {}]
  %s14 = inlined_call_operand.vmem [shape: f32[16,32], index: 14, kind: output, shape index: {}]
  %s15 = sld [smem:[#allocation0]]
  $region66: #{roberta_encoder.4} parent=0
    _
  %s17 = ssub.s32 1, %s15
  %s18 = scalar_select 0, %s17, %s15
  // Predicated region
  $region2: #{roberta_encoder.4} parent=0 // pred_check
    _
  $region3: #{roberta_encoder.4} parent=0 // pred_check_branch
    %20 = sbr.rel (0) target = $region5
  $region4: #{roberta_encoder.4} parent=0 // pred_region
    _
  $region5: #{roberta_encoder.4} parent=0 // pred_fallthru
    _
  // Predicated region
  $region6: #{roberta_encoder.4} parent=0 // pred_check
    _
  $region7: #{roberta_encoder.4} parent=0 // pred_check_branch
    %22 = sbr.rel (0) target = $region9
  $region8: #{roberta_encoder.4} parent=0 // pred_region
    _
  $region9: #{roberta_encoder.4} parent=0 // pred_fallthru
    _
  // Predicated region
  $region10: #{roberta_encoder.4} parent=0 // pred_check
    _
  $region11: #{roberta_encoder.4} parent=0 // pred_check_branch
    %24 = sbr.rel (0) target = $region13
  $region12: #{roberta_encoder.4} parent=0 // pred_region
    _
  $region13: #{roberta_encoder.4} parent=0 // pred_fallthru
    _
  // Predicated region
  $region14: #{roberta_encoder.4} parent=0 // pred_check
    _
  $region15: #{roberta_encoder.4} parent=0 // pred_check_branch
    %26 = sbr.rel (0) target = $region17
  $region16: #{roberta_encoder.4} parent=0 // pred_region
    _
  $region17: #{roberta_encoder.4} parent=0 // pred_fallthru
    _
  // Predicated region
  $region18: #{roberta_encoder.4} parent=0 // pred_check
    _
  $region19: #{roberta_encoder.4} parent=0 // pred_check_branch
    %28 = sbr.rel (0) target = $region21
  $region20: #{roberta_encoder.4} parent=0 // pred_region
    _
  $region21: #{roberta_encoder.4} parent=0 // pred_fallthru
    _
  // Predicated region
  $region22: #{roberta_encoder.4} parent=0 // pred_check
    _
  $region23: #{roberta_encoder.4} parent=0 // pred_check_branch
    %30 = sbr.rel (0) target = $region25
  $region24: #{roberta_encoder.4} parent=0 // pred_region
    _
  $region25: #{roberta_encoder.4} parent=0 // pred_fallthru
    _
  // Predicated region
  $region26: #{roberta_encoder.4} parent=0 // pred_check
    _
  $region27: #{roberta_encoder.4} parent=0 // pred_check_branch
    %32 = sbr.rel (0) target = $region29
  $region28: #{roberta_encoder.4} parent=0 // pred_region
    _
  $region29: #{roberta_encoder.4} parent=0 // pred_fallthru
    _
  // Predicated region
  $region30: #{roberta_encoder.4} parent=0 // pred_check
    _
  $region31: #{roberta_encoder.4} parent=0 // pred_check_branch
    %34 = sbr.rel (0) target = $region33
  $region32: #{roberta_encoder.4} parent=0 // pred_region
    _
  $region33: #{roberta_encoder.4} parent=0 // pred_fallthru
    _
  // Predicated region
  $region34: #{roberta_encoder.4} parent=0 // pred_check
    _
  $region35: #{roberta_encoder.4} parent=0 // pred_check_branch
    %36 = sbr.rel (0) target = $region37
  $region36: #{roberta_encoder.4} parent=0 // pred_region
    _
  $region37: #{roberta_encoder.4} parent=0 // pred_fallthru
    _
  // Predicated region
  $region38: #{roberta_encoder.4} parent=0 // pred_check
    _
  $region39: #{roberta_encoder.4} parent=0 // pred_check_branch
    %38 = sbr.rel (0) target = $region41
  $region40: #{roberta_encoder.4} parent=0 // pred_region
    _
  $region41: #{roberta_encoder.4} parent=0 // pred_fallthru
    _
  // Predicated region
  $region42: #{roberta_encoder.4} parent=0 // pred_check
    _
  $region43: #{roberta_encoder.4} parent=0 // pred_check_branch
    %40 = sbr.rel (0) target = $region45
  $region44: #{roberta_encoder.4} parent=0 // pred_region
    _
  $region45: #{roberta_encoder.4} parent=0 // pred_fallthru
    _
  // Predicated region
  $region46: #{roberta_encoder.4} parent=0 // pred_check
    _
  $region47: #{roberta_encoder.4} parent=0 // pred_check_branch
    %42 = sbr.rel (0) target = $region49
  $region48: #{roberta_encoder.4} parent=0 // pred_region
    _
  $region49: #{roberta_encoder.4} parent=0 // pred_fallthru
    _
  // Predicated region
  $region50: #{roberta_encoder.4} parent=0 // pred_check
    _
  $region51: #{roberta_encoder.4} parent=0 // pred_check_branch
    %44 = sbr.rel (0) target = $region53
  $region52: #{roberta_encoder.4} parent=0 // pred_region
    _
  $region53: #{roberta_encoder.4} parent=0 // pred_fallthru
    _
  // Predicated region
  $region54: #{roberta_encoder.4} parent=0 // pred_check
    _
  $region55: #{roberta_encoder.4} parent=0 // pred_check_branch
    %46 = sbr.rel (0) target = $region57
  $region56: #{roberta_encoder.4} parent=0 // pred_region
    _
  $region57: #{roberta_encoder.4} parent=0 // pred_fallthru
    _
  %v47 = vld [vmem:[%s0] sm:$0xff]
  %v48 = vld [vmem:[%s0 + $0x8] sm:$0xff]
  %v49 = vld [vmem:[%s2] sm:$0xff]
  %v50 = vld [vmem:[%s2 + $0x8] sm:$0xff]
  %v51 = vld [vmem:[%s2 + $0x10] sm:$0xff]
  %v52 = vld [vmem:[%s2 + $0x18] sm:$0xff]
  %v53 = vld [vmem:[%s3] sm:$0x1]
  %v55 = vperm.slane %v53, 0
  %vm57 = vcmask 261120
  %v59 = vsel %vm57, %v47, 0
  %v62 = vsel %vm57, %v48, 0
  %64 = vmatpush.msra.mxu0 0.0
  %65 = vmatpush.msra.mxu0 0.0
  %66 = vmatpush.msra.mxu0 0.0
  %67 = vmatpush.msra.mxu0 0.0
  %68 = vmatpush.msra.mxu0 0.0
  %69 = vmatpush.msra.mxu0 0.0
  %70 = vmatpush.msra.mxu0 0.0
  %71 = vmatpush.msra.mxu0 0.0
  %72 = vmatpush.msra.mxu0 0.0
  %73 = vmatpush.msra.mxu0 0.0
  %74 = vmatpush.msra.mxu0 0.0
  %75 = vmatpush.msra.mxu0 0.0
  %76 = vmatpush.msra.mxu0 %v52
  %77 = vmatpush.msra.mxu0 %v51
  %78 = vmatpush.msra.mxu0 %v50
  %79 = vmatpush.msra.mxu0 %v49
  %80 = vmatmul.f32.gmra.mxu0 %v59
  %v81 = vpop.f32.mrf.mxu0
  %v82 = vadd.f32 %v55, %v81
  %83 = vmatmul.f32.gmra.mxu0 %v62
  %v84 = vpop.f32.mrf.mxu0
  %v85 = vadd.f32 %v55, %v84
  %86 = vdwg.mxu0
  %v87 = vld [vmem:[%s1] sm:$0x3]
  %89 = vrot.lane.b32.xlu0 %v82, 96
  %v90 = vpop.permute.xlu0 %89
  %vm91 = vcmask 130048
  %v92 = vsel %vm91, %v82, 0
  %v94 = vsel %vm91, %v90, 0
  %96 = vmatpush.xpose.msra.mxu0 0.0
  %97 = vmatpush.xpose.msra.mxu0 0.0
  %98 = vmatpush.xpose.msra.mxu0 0.0
  %99 = vmatpush.xpose.msra.mxu0 0.0
  %100 = vmatpush.xpose.msra.mxu0 0.0
  %101 = vmatpush.xpose.msra.mxu0 0.0
  %102 = vmatpush.xpose.msra.mxu0 0.0
  %103 = vmatpush.xpose.msra.mxu0 0.0
  %104 = vmatpush.xpose.msra.mxu0 0.0
  %105 = vmatpush.xpose.msra.mxu0 0.0
  %106 = vmatpush.xpose.msra.mxu0 0.0
  %107 = vmatpush.xpose.msra.mxu0 0.0
  %108 = vmatpush.xpose.msra.mxu0 0.0
  %109 = vmatpush.xpose.msra.mxu0 0.0
  %110 = vmatpush.xpose.msra.mxu0 0.0
  %111 = vmatpush.xpose.msra.mxu0 %v94
  %112 = vmatmul.f32.gmra.mxu0 %v92
  %v113 = vpop.f32.mrf.mxu0
  %v114 = vadd.f32 0.0, %v113
  %115 = vdwg.mxu0
  %v116 = vmul.f32 %v114, 0.25
  %v117 = vperm.slane %v87, 0
  %v118 = vadd.f32 %v116, %v117
  %vm119 = vcmask 64512
  %v120 = vsel %vm119, %v118, -inf
  %121 = vmax.xlane.f32.xlu0 %v120
  %v122 = vpop.xlane.xlu0 %121
  %v123 = vsub.f32 %v118, %v122
  %v124 = vmul.f32 %v123, 1.442695
  %v125 = vpow.pop %v124
  %v126 = vsel %vm119, %v125, 0.0
  %127 = vadd.xlane.f32.xlu0 %v126
  %v128 = vpop.xlane.xlu0 %127
  %v129 = vrcp.pop %v128
  %v130 = vmul.f32 %v125, %v129
  %131 = vrot.lane.b32.xlu0 %v82, 64
  %v132 = vpop.permute.xlu0 %131
  %v135 = vsel %vm119, %v130, 0
  %137 = vmatpush.msra.mxu0 0.0
  %138 = vmatpush.msra.mxu0 0.0
  %139 = vmatpush.msra.mxu0 0.0
  %140 = vmatpush.msra.mxu0 0.0
  %141 = vmatpush.msra.mxu0 0.0
  %142 = vmatpush.msra.mxu0 0.0
  %143 = vmatpush.msra.mxu0 0.0
  %144 = vmatpush.msra.mxu0 0.0
  %145 = vmatpush.msra.mxu0 0.0
  %146 = vmatpush.msra.mxu0 0.0
  %147 = vmatpush.msra.mxu0 0.0
  %148 = vmatpush.msra.mxu0 0.0
  %149 = vmatpush.msra.mxu0 0.0
  %150 = vmatpush.msra.mxu0 0.0
  %151 = vmatpush.msra.mxu0 0.0
  %152 = vmatpush.msra.mxu0 %v132
  %153 = vmatmul.f32.gmra.mxu0 %v135
  %v154 = vpop.f32.mrf.mxu0
  %v155 = vadd.f32 0.0, %v154
  %156 = vdwg.mxu0
  %157 = vst.msk [vmem:[#allocation2] sm:$0xff] %vm91, %v155
  %158 = vrot.lane.b32.xlu0 %v82, 112
  %v159 = vpop.permute.xlu0 %158
  %160 = vrot.lane.b32.xlu0 %v82, 80
  %v161 = vpop.permute.xlu0 %160
  %v162 = vsel %vm91, %v159, 0
  %v164 = vsel %vm91, %v161, 0
  %166 = vmatpush.xpose.msra.mxu0 0.0
  %167 = vmatpush.xpose.msra.mxu0 0.0
  %168 = vmatpush.xpose.msra.mxu0 0.0
  %169 = vmatpush.xpose.msra.mxu0 0.0
  %170 = vmatpush.xpose.msra.mxu0 0.0
  %171 = vmatpush.xpose.msra.mxu0 0.0
  %172 = vmatpush.xpose.msra.mxu0 0.0
  %173 = vmatpush.xpose.msra.mxu0 0.0
  %174 = vmatpush.xpose.msra.mxu0 0.0
  %175 = vmatpush.xpose.msra.mxu0 0.0
  %176 = vmatpush.xpose.msra.mxu0 0.0
  %177 = vmatpush.xpose.msra.mxu0 0.0
  %178 = vmatpush.xpose.msra.mxu0 0.0
  %179 = vmatpush.xpose.msra.mxu0 0.0
  %180 = vmatpush.xpose.msra.mxu0 0.0
  %181 = vmatpush.xpose.msra.mxu0 %v164
  %182 = vmatmul.f32.gmra.mxu0 %v162
  %v183 = vpop.f32.mrf.mxu0
  %v184 = vadd.f32 0.0, %v183
  %185 = vdwg.mxu0
  %v186 = vmul.f32 %v184, 0.25
  %v187 = vadd.f32 %v186, %v117
  %v188 = vsel %vm119, %v187, -inf
  %189 = vmax.xlane.f32.xlu0 %v188
  %v190 = vpop.xlane.xlu0 %189
  %v191 = vsub.f32 %v187, %v190
  %v192 = vmul.f32 %v191, 1.442695
  %v193 = vpow.pop %v192
  %v194 = vsel %vm119, %v193, 0.0
  %195 = vadd.xlane.f32.xlu0 %v194
  %v196 = vpop.xlane.xlu0 %195
  %v197 = vrcp.pop %v196
  %v198 = vmul.f32 %v193, %v197
  %199 = vrot.lane.b32.xlu0 %v82, 48
  %v200 = vpop.permute.xlu0 %199
  %v203 = vsel %vm119, %v198, 0
  %205 = vmatpush.msra.mxu0 0.0
  %206 = vmatpush.msra.mxu0 0.0
  %207 = vmatpush.msra.mxu0 0.0
  %208 = vmatpush.msra.mxu0 0.0
  %209 = vmatpush.msra.mxu0 0.0
  %210 = vmatpush.msra.mxu0 0.0
  %211 = vmatpush.msra.mxu0 0.0
  %212 = vmatpush.msra.mxu0 0.0
  %213 = vmatpush.msra.mxu0 0.0
  %214 = vmatpush.msra.mxu0 0.0
  %215 = vmatpush.msra.mxu0 0.0
  %216 = vmatpush.msra.mxu0 0.0
  %217 = vmatpush.msra.mxu0 0.0
  %218 = vmatpush.msra.mxu0 0.0
  %219 = vmatpush.msra.mxu0 0.0
  %220 = vmatpush.msra.mxu0 %v200
  %221 = vmatmul.f32.gmra.mxu0 %v203
  %v222 = vpop.f32.mrf.mxu0
  %v223 = vadd.f32 0.0, %v222
  %224 = vdwg.mxu0
  %226 = vrot.lane.b32.xlu0 %v223, 16
  %v227 = vpop.permute.xlu0 %226
  %vm229 = vcmask 261248
  %230 = vst.msk [vmem:[#allocation2] sm:$0xff] %vm229, %v227
  %232 = vrot.lane.b32.xlu0 %v85, 96
  %v233 = vpop.permute.xlu0 %232
  %v234 = vsel %vm91, %v85, 0
  %v236 = vsel %vm91, %v233, 0
  %238 = vmatpush.xpose.msra.mxu0 0.0
  %239 = vmatpush.xpose.msra.mxu0 0.0
  %240 = vmatpush.xpose.msra.mxu0 0.0
  %241 = vmatpush.xpose.msra.mxu0 0.0
  %242 = vmatpush.xpose.msra.mxu0 0.0
  %243 = vmatpush.xpose.msra.mxu0 0.0
  %244 = vmatpush.xpose.msra.mxu0 0.0
  %245 = vmatpush.xpose.msra.mxu0 0.0
  %246 = vmatpush.xpose.msra.mxu0 0.0
  %247 = vmatpush.xpose.msra.mxu0 0.0
  %248 = vmatpush.xpose.msra.mxu0 0.0
  %249 = vmatpush.xpose.msra.mxu0 0.0
  %250 = vmatpush.xpose.msra.mxu0 0.0
  %251 = vmatpush.xpose.msra.mxu0 0.0
  %252 = vmatpush.xpose.msra.mxu0 0.0
  %253 = vmatpush.xpose.msra.mxu0 %v236
  %254 = vmatmul.f32.gmra.mxu0 %v234
  %v255 = vpop.f32.mrf.mxu0
  %v256 = vadd.f32 0.0, %v255
  %257 = vdwg.mxu0
  %v258 = vmul.f32 %v256, 0.25
  %v259 = vperm.slane %v87, 1
  %v260 = vadd.f32 %v258, %v259
  %v261 = vsel %vm119, %v260, -inf
  %262 = vmax.xlane.f32.xlu0 %v261
  %v263 = vpop.xlane.xlu0 %262
  %v264 = vsub.f32 %v260, %v263
  %v265 = vmul.f32 %v264, 1.442695
  %v266 = vpow.pop %v265
  %v267 = vsel %vm119, %v266, 0.0
  %268 = vadd.xlane.f32.xlu0 %v267
  %v269 = vpop.xlane.xlu0 %268
  %v270 = vrcp.pop %v269
  %v271 = vmul.f32 %v266, %v270
  %272 = vrot.lane.b32.xlu0 %v85, 64
  %v273 = vpop.permute.xlu0 %272
  %v276 = vsel %vm119, %v271, 0
  %278 = vmatpush.msra.mxu0 0.0
  %279 = vmatpush.msra.mxu0 0.0
  %280 = vmatpush.msra.mxu0 0.0
  %281 = vmatpush.msra.mxu0 0.0
  %282 = vmatpush.msra.mxu0 0.0
  %283 = vmatpush.msra.mxu0 0.0
  %284 = vmatpush.msra.mxu0 0.0
  %285 = vmatpush.msra.mxu0 0.0
  %286 = vmatpush.msra.mxu0 0.0
  %287 = vmatpush.msra.mxu0 0.0
  %288 = vmatpush.msra.mxu0 0.0
  %289 = vmatpush.msra.mxu0 0.0
  %290 = vmatpush.msra.mxu0 0.0
  %291 = vmatpush.msra.mxu0 0.0
  %292 = vmatpush.msra.mxu0 0.0
  %293 = vmatpush.msra.mxu0 %v273
  %294 = vmatmul.f32.gmra.mxu0 %v276
  %v295 = vpop.f32.mrf.mxu0
  %v296 = vadd.f32 0.0, %v295
  %297 = vdwg.mxu0
  %298 = vst.msk [vmem:[#allocation2 + $0x8] sm:$0xff] %vm91, %v296
  %299 = vrot.lane.b32.xlu0 %v85, 112
  %v300 = vpop.permute.xlu0 %299
  %301 = vrot.lane.b32.xlu0 %v85, 80
  %v302 = vpop.permute.xlu0 %301
  %v303 = vsel %vm91, %v300, 0
  %v305 = vsel %vm91, %v302, 0
  %307 = vmatpush.xpose.msra.mxu0 0.0
  %308 = vmatpush.xpose.msra.mxu0 0.0
  %309 = vmatpush.xpose.msra.mxu0 0.0
  %310 = vmatpush.xpose.msra.mxu0 0.0
  %311 = vmatpush.xpose.msra.mxu0 0.0
  %312 = vmatpush.xpose.msra.mxu0 0.0
  %313 = vmatpush.xpose.msra.mxu0 0.0
  %314 = vmatpush.xpose.msra.mxu0 0.0
  %315 = vmatpush.xpose.msra.mxu0 0.0
  %316 = vmatpush.xpose.msra.mxu0 0.0
  %317 = vmatpush.xpose.msra.mxu0 0.0
  %318 = vmatpush.xpose.msra.mxu0 0.0
  %319 = vmatpush.xpose.msra.mxu0 0.0
  %320 = vmatpush.xpose.msra.mxu0 0.0
  %321 = vmatpush.xpose.msra.mxu0 0.0
  %322 = vmatpush.xpose.msra.mxu0 %v305
  %323 = vmatmul.f32.gmra.mxu0 %v303
  %v324 = vpop.f32.mrf.mxu0
  %v325 = vadd.f32 0.0, %v324
  %326 = vdwg.mxu0
  %v327 = vmul.f32 %v325, 0.25
  %v328 = vadd.f32 %v327, %v259
  %v329 = vsel %vm119, %v328, -inf
  %330 = vmax.xlane.f32.xlu0 %v329
  %v331 = vpop.xlane.xlu0 %330
  %v332 = vsub.f32 %v328, %v331
  %v333 = vmul.f32 %v332, 1.442695
  %v334 = vpow.pop %v333
  %v335 = vsel %vm119, %v334, 0.0
  %336 = vadd.xlane.f32.xlu0 %v335
  %v337 = vpop.xlane.xlu0 %336
  %v338 = vrcp.pop %v337
  %v339 = vmul.f32 %v334, %v338
  %340 = vrot.lane.b32.xlu0 %v85, 48
  %v341 = vpop.permute.xlu0 %340
  %v344 = vsel %vm119, %v339, 0
  %346 = vmatpush.msra.mxu0 0.0
  %347 = vmatpush.msra.mxu0 0.0
  %348 = vmatpush.msra.mxu0 0.0
  %349 = vmatpush.msra.mxu0 0.0
  %350 = vmatpush.msra.mxu0 0.0
  %351 = vmatpush.msra.mxu0 0.0
  %352 = vmatpush.msra.mxu0 0.0
  %353 = vmatpush.msra.mxu0 0.0
  %354 = vmatpush.msra.mxu0 0.0
  %355 = vmatpush.msra.mxu0 0.0
  %356 = vmatpush.msra.mxu0 0.0
  %357 = vmatpush.msra.mxu0 0.0
  %358 = vmatpush.msra.mxu0 0.0
  %359 = vmatpush.msra.mxu0 0.0
  %360 = vmatpush.msra.mxu0 0.0
  %361 = vmatpush.msra.mxu0 %v341
  %362 = vmatmul.f32.gmra.mxu0 %v344
  %v363 = vpop.f32.mrf.mxu0
  %v364 = vadd.f32 0.0, %v363
  %365 = vdwg.mxu0
  %367 = vrot.lane.b32.xlu0 %v364, 16
  %v368 = vpop.permute.xlu0 %367
  %370 = vst.msk [vmem:[#allocation2 + $0x8] sm:$0xff] %vm229, %v368
  %v371 = vld [vmem:[#allocation2] sm:$0xff]
  %v372 = vld [vmem:[#allocation2 + $0x8] sm:$0xff]
  %v373 = vld [vmem:[%s4] sm:$0xff]
  %v374 = vld [vmem:[%s4 + $0x8] sm:$0xff]
  %v375 = vld [vmem:[%s4 + $0x10] sm:$0xff]
  %v376 = vld [vmem:[%s4 + $0x18] sm:$0xff]
  %v377 = vld [vmem:[%s5] sm:$0x1]
  %v379 = vperm.slane %v377, 0
  %v382 = vsel %vm57, %v371, 0
  %v385 = vsel %vm57, %v372, 0
  %387 = vmatpush.msra.mxu0 0.0
  %388 = vmatpush.msra.mxu0 0.0
  %389 = vmatpush.msra.mxu0 0.0
  %390 = vmatpush.msra.mxu0 0.0
  %391 = vmatpush.msra.mxu0 0.0
  %392 = vmatpush.msra.mxu0 0.0
  %393 = vmatpush.msra.mxu0 0.0
  %394 = vmatpush.msra.mxu0 0.0
  %395 = vmatpush.msra.mxu0 0.0
  %396 = vmatpush.msra.mxu0 0.0
  %397 = vmatpush.msra.mxu0 0.0
  %398 = vmatpush.msra.mxu0 0.0
  %399 = vmatpush.msra.mxu0 %v376
  %400 = vmatpush.msra.mxu0 %v375
  %401 = vmatpush.msra.mxu0 %v374
  %402 = vmatpush.msra.mxu0 %v373
  %403 = vmatmul.f32.gmra.mxu0 %v382
  %v404 = vpop.f32.mrf.mxu0
  %v405 = vadd.f32 %v379, %v404
  %406 = vmatmul.f32.gmra.mxu0 %v385
  %v407 = vpop.f32.mrf.mxu0
  %v408 = vadd.f32 %v379, %v407
  %409 = vdwg.mxu0
  %v410 = vadd.f32 %v405, %v47
  %v411 = vadd.f32 %v408, %v48
  %v412 = vld [vmem:[%s6] sm:$0x1]
  %v413 = vld [vmem:[%s7] sm:$0x1]
  %v414 = vsel %vm57, %v410, 0.0
  %415 = vadd.xlane.f32.xlu0 %v414
  %v416 = vpop.xlane.xlu0 %415
  %v417 = vsel %vm57, %v411, 0.0
  %418 = vadd.xlane.f32.xlu0 %v417
  %v419 = vpop.xlane.xlu0 %418
  %v420 = vrcp.pop 32.0
  %v421 = vmul.f32 32.0, %v420
  %v422 = vsub.f32 1.0, %v421
  %v423 = vmul.f32 %v420, %v422
  %v424 = vadd.f32 %v420, %v423
  %vm425 = vweird.f32 %v420
  %v426 = vsel %vm425, %v420, %v424
  %v427 = vmul.f32 %v416, %v426
  %v428 = vmul.f32 %v419, %v426
  %v429 = vsub.f32 %v410, %v427
  %v430 = vsub.f32 %v411, %v428
  %v431 = vmul.f32 %v429, %v429
  %v432 = vmul.f32 %v430, %v430
  %v433 = vsel %vm57, %v431, 0.0
  %434 = vadd.xlane.f32.xlu0 %v433
  %v435 = vpop.xlane.xlu0 %434
  %v436 = vsel %vm57, %v432, 0.0
  %437 = vadd.xlane.f32.xlu0 %v436
  %v438 = vpop.xlane.xlu0 %437
  %v439 = vmul.f32 %v435, %v426
  %v440 = vmul.f32 %v438, %v426
  %v441 = vadd.f32 %v439, 1e-05
  %v442 = vadd.f32 %v440, 1e-05
  %v443 = vrsqrt.pop %v441
  %v444 = vmul.f32 %v443, %v441
  %v445 = vmul.f32 %v444, %v443
  %v446 = vmul.f32 0.5, %v445
  %v447 = vsub.f32 1.5, %v446
  %v448 = vmul.f32 %v443, %v447
  %vm449 = vweird.f32 %v441
  %vm450 = vweird.f32 %v443
  %vm451 = vmor %vm449, %vm450
  %v452 = vsel %vm451, %v443, %v448
  %v453 = vrsqrt.pop %v442
  %v454 = vmul.f32 %v453, %v442
  %v455 = vmul.f32 %v454, %v453
  %v456 = vmul.f32 0.5, %v455
  %v457 = vsub.f32 1.5, %v456
  %v458 = vmul.f32 %v453, %v457
  %vm459 = vweird.f32 %v442
  %vm460 = vweird.f32 %v453
  %vm461 = vmor %vm459, %vm460
  %v462 = vsel %vm461, %v453, %v458
  %v463 = vmul.f32 %v429, %v452
  %v464 = vmul.f32 %v430, %v462
  %v466 = vperm.slane %v412, 0
  %v468 = vmul.f32 %v463, %v466
  %v469 = vmul.f32 %v464, %v466
  %v471 = vperm.slane %v413, 0
  %v473 = vadd.f32 %v468, %v471
  %v474 = vadd.f32 %v469, %v471
  %v475 = vld [vmem:[%s8] sm:$0xff]
  %v476 = vld [vmem:[%s8 + $0x8] sm:$0xff]
  %v477 = vld [vmem:[%s8 + $0x10] sm:$0xff]
  %v478 = vld [vmem:[%s8 + $0x18] sm:$0xff]
  %v479 = vld [vmem:[%s9] sm:$0x1]
  %v481 = vperm.slane %v479, 0
  %v484 = vsel %vm57, %v473, 0
  %v487 = vsel %vm57, %v474, 0
  %489 = vmatpush.msra.mxu0 0.0
  %490 = vmatpush.msra.mxu0 0.0
  %491 = vmatpush.msra.mxu0 0.0
  %492 = vmatpush.msra.mxu0 0.0
  %493 = vmatpush.msra.mxu0 0.0
  %494 = vmatpush.msra.mxu0 0.0
  %495 = vmatpush.msra.mxu0 0.0
  %496 = vmatpush.msra.mxu0 0.0
  %497 = vmatpush.msra.mxu0 0.0
  %498 = vmatpush.msra.mxu0 0.0
  %499 = vmatpush.msra.mxu0 0.0
  %500 = vmatpush.msra.mxu0 0.0
  %501 = vmatpush.msra.mxu0 %v478
  %502 = vmatpush.msra.mxu0 %v477
  %503 = vmatpush.msra.mxu0 %v476
  %504 = vmatpush.msra.mxu0 %v475
  %505 = vmatmul.f32.gmra.mxu0 %v484
  %v506 = vpop.f32.mrf.mxu0
  %v507 = vadd.f32 %v481, %v506
  %508 = vmatmul.f32.gmra.mxu0 %v487
  %v509 = vpop.f32.mrf.mxu0
  %v510 = vadd.f32 %v481, %v509
  %511 = vdwg.mxu0
  %v512 = vmul.f32 %v507, 0.5
  %v513 = vmul.f32 %v510, 0.5
  %v514 = vmul.f32 %v507, 0.044715
  %v515 = vmul.f32 %v510, 0.044715
  %v516 = vmul.f32 %v514, %v507
  %v517 = vmul.f32 %v515, %v510
  %v518 = vmul.f32 %v516, %v507
  %v519 = vmul.f32 %v517, %v510
  %v520 = vadd.f32 %v507, %v518
  %v521 = vadd.f32 %v510, %v519
  %v522 = vmul.f32 %v520, 0.7978846
  %v523 = vmul.f32 %v521, 0.7978846
  %v524 = vtanh.pop %v522
  %v525 = vtanh.pop %v523
  %v526 = vadd.f32 %v524, 1.0
  %v527 = vadd.f32 %v525, 1.0
  %v528 = vmul.f32 %v512, %v526
  %v529 = vmul.f32 %v513, %v527
  %v530 = vld [vmem:[%s10] sm:$0xff]
  %v531 = vld [vmem:[%s10 + $0x8] sm:$0xff]
  %v532 = vld [vmem:[%s10 + $0x10] sm:$0xff]
  %v533 = vld [vmem:[%s10 + $0x18] sm:$0xff]
  %v534 = vld [vmem:[%s10 + $0x20] sm:$0xff]
  %v535 = vld [vmem:[%s10 + $0x28] sm:$0xff]
  %v536 = vld [vmem:[%s10 + $0x30] sm:$0xff]
  %v537 = vld [vmem:[%s10 + $0x38] sm:$0xff]
  %v538 = vld [vmem:[%s11] sm:$0x1]
  %v540 = vperm.slane %v538, 0
  %vm542 = vcmask 523264
  %v544 = vsel %vm542, %v528, 0
  %v547 = vsel %vm542, %v529, 0
  %549 = vmatpush.msra.mxu0 0.0
  %550 = vmatpush.msra.mxu0 0.0
  %551 = vmatpush.msra.mxu0 0.0
  %552 = vmatpush.msra.mxu0 0.0
  %553 = vmatpush.msra.mxu0 0.0
  %554 = vmatpush.msra.mxu0 0.0
  %555 = vmatpush.msra.mxu0 0.0
  %556 = vmatpush.msra.mxu0 0.0
  %557 = vmatpush.msra.mxu0 %v537
  %558 = vmatpush.msra.mxu0 %v536
  %559 = vmatpush.msra.mxu0 %v535
  %560 = vmatpush.msra.mxu0 %v534
  %561 = vmatpush.msra.mxu0 %v533
  %562 = vmatpush.msra.mxu0 %v532
  %563 = vmatpush.msra.mxu0 %v531
  %564 = vmatpush.msra.mxu0 %v530
  %565 = vmatmul.f32.gmra.mxu0 %v544
  %v566 = vpop.f32.mrf.mxu0
  %v567 = vadd.f32 %v540, %v566
  %568 = vmatmul.f32.gmra.mxu0 %v547
  %v569 = vpop.f32.mrf.mxu0
  %v570 = vadd.f32 %v540, %v569
  %571 = vdwg.mxu0
  %v572 = vadd.f32 %v567, %v473
  %v573 = vadd.f32 %v570, %v474
  %v574 = vld [vmem:[%s12] sm:$0x1]
  %v575 = vld [vmem:[%s13] sm:$0x1]
  %v576 = vsel %vm57, %v572, 0.0
  %577 = vadd.xlane.f32.xlu0 %v576
  %v578 = vpop.xlane.xlu0 %577
  %v579 = vsel %vm57, %v573, 0.0
  %580 = vadd.xlane.f32.xlu0 %v579
  %v581 = vpop.xlane.xlu0 %580
  %v582 = vmul.f32 %v578, %v426
  %v583 = vmul.f32 %v581, %v426
  %v584 = vsub.f32 %v572, %v582
  %v585 = vsub.f32 %v573, %v583
  %v586 = vmul.f32 %v584, %v584
  %v587 = vmul.f32 %v585, %v585
  %v588 = vsel %vm57, %v586, 0.0
  %589 = vadd.xlane.f32.xlu0 %v588
  %v590 = vpop.xlane.xlu0 %589
  %v591 = vsel %vm57, %v587, 0.0
  %592 = vadd.xlane.f32.xlu0 %v591
  %v593 = vpop.xlane.xlu0 %592
  %v594 = vmul.f32 %v590, %v426
  %v595 = vmul.f32 %v593, %v426
  %v596 = vadd.f32 %v594, 1e-05
  %v597 = vadd.f32 %v595, 1e-05
  %v598 = vrsqrt.pop %v596
  %v599 = vmul.f32 %v598, %v596
  %v600 = vmul.f32 %v599, %v598
  %v601 = vmul.f32 0.5, %v600
  %v602 = vsub.f32 1.5, %v601
  %v603 = vmul.f32 %v598, %v602
  %vm604 = vweird.f32 %v596
  %vm605 = vweird.f32 %v598
  %vm606 = vmor %vm604, %vm605
  %v607 = vsel %vm606, %v598, %v603
  %v608 = vrsqrt.pop %v597
  %v609 = vmul.f32 %v608, %v597
  %v610 = vmul.f32 %v609, %v608
  %v611 = vmul.f32 0.5, %v610
  %v612 = vsub.f32 1.5, %v611
  %v613 = vmul.f32 %v608, %v612
  %vm614 = vweird.f32 %v597
  %vm615 = vweird.f32 %v608
  %vm616 = vmor %vm614, %vm615
  %v617 = vsel %vm616, %v608, %v613
  %v618 = vmul.f32 %v584, %v607
  %v619 = vmul.f32 %v585, %v617
  %v621 = vperm.slane %v574, 0
  %v623 = vmul.f32 %v618, %v621
  %v624 = vmul.f32 %v619, %v621
  %v626 = vperm.slane %v575, 0
  %v628 = vadd.f32 %v623, %v626
  %v629 = vadd.f32 %v624, %v626
  %630 = vst.msk [vmem:[%s14] sm:$0xff] %vm57, %v628
  %631 = vst.msk [vmem:[%s14 + $0x8] sm:$0xff] %vm57, %v629
  // Predicated region
  $region58: #{roberta_encoder.4} parent=0 // pred_check
    _
  $region59: #{roberta_encoder.4} parent=0 // pred_check_branch
    %633 = sbr.rel (0) target = $region61
  $region60: #{roberta_encoder.4} parent=0 // pred_region
    _
  $region61: #{roberta_encoder.4} parent=0 // pred_fallthru
    _
  // Predicated region
  $region62: #{roberta_encoder.4} parent=0 // pred_check
    _
  $region63: #{roberta_encoder.4} parent=0 // pred_check_branch
    %635 = sbr.rel (0) target = $region65
  $region64: #{roberta_encoder.4} parent=0 // pred_region
    _
  $region65: #{roberta_encoder.4} parent=0 // pred_fallthru
    _

// kernel: roberta_encoder.5
$region0: #{roberta_encoder.5}
  #allocation0 [shape = 'u32[]', space=smem, size = 0x4, offset = 0x4, fixed_abs, tag = 'smem constant byte address 0x4 - core index']
  #allocation1 [shape = 'u32[72,128]{1,0:T(1,128)}', space=vmem, size = 0x9000, scoped, tag = 'internal scratch']
  #allocation2 [shape = 'f32[16,32]{1,0:T(8,128)}', space=vmem, size = 0x2000, scoped, tag = 'scratch operand']
  %s0 = inlined_call_operand.vmem [shape: f32[16,32], index: 0, kind: input, shape index: {}]
  %s1 = inlined_call_operand.vmem [shape: f32[2,8], index: 1, kind: input, shape index: {}]
  %s2 = inlined_call_operand.vmem [shape: f32[32,96], index: 2, kind: input, shape index: {}]
  %s3 = inlined_call_operand.vmem [shape: f32[1,96], index: 3, kind: input, shape index: {}]
  %s4 = inlined_call_operand.vmem [shape: f32[32,32], index: 4, kind: input, shape index: {}]
  %s5 = inlined_call_operand.vmem [shape: f32[1,32], index: 5, kind: input, shape index: {}]
  %s6 = inlined_call_operand.vmem [shape: f32[1,32], index: 6, kind: input, shape index: {}]
  %s7 = inlined_call_operand.vmem [shape: f32[1,32], index: 7, kind: input, shape index: {}]
  %s8 = inlined_call_operand.vmem [shape: f32[32,64], index: 8, kind: input, shape index: {}]
  %s9 = inlined_call_operand.vmem [shape: f32[1,64], index: 9, kind: input, shape index: {}]
  %s10 = inlined_call_operand.vmem [shape: f32[64,32], index: 10, kind: input, shape index: {}]
  %s11 = inlined_call_operand.vmem [shape: f32[1,32], index: 11, kind: input, shape index: {}]
  %s12 = inlined_call_operand.vmem [shape: f32[1,32], index: 12, kind: input, shape index: {}]
  %s13 = inlined_call_operand.vmem [shape: f32[1,32], index: 13, kind: input, shape index: {}]
  %s14 = inlined_call_operand.hbm [shape: f32[16,32], index: 14, kind: output, shape index: {}]
  %s15 = sld [smem:[#allocation0]]
  $region66: #{roberta_encoder.5} parent=0
    _
  %s17 = ssub.s32 1, %s15
  %s18 = scalar_select 0, %s17, %s15
  $region1: #{roberta_encoder.5} parent=0
    #allocation3 [shape = 'u8[8192]{0}', space=vmem, size = 0x2000, scoped, tag = 'output window, operand 0, single buffered']
    #allocation4 [shape = 's32[1]{0}', space=sflag, size = 0x4, scoped, tag = 'scoped memory for roberta_encoder.5']
    %19 = vsyncpa [#allocation4], 0
    // Predicated region
    $region2: #{roberta_encoder.5} parent=1 // pred_check
      _
    $region3: #{roberta_encoder.5} parent=1 // pred_check_branch
      %21 = sbr.rel (0) target = $region5
    $region4: #{roberta_encoder.5} parent=1 // pred_region
      _
    $region5: #{roberta_encoder.5} parent=1 // pred_fallthru
      _
    // Predicated region
    $region6: #{roberta_encoder.5} parent=1 // pred_check
      _
    $region7: #{roberta_encoder.5} parent=1 // pred_check_branch
      %23 = sbr.rel (0) target = $region9
    $region8: #{roberta_encoder.5} parent=1 // pred_region
      _
    $region9: #{roberta_encoder.5} parent=1 // pred_fallthru
      _
    // Predicated region
    $region10: #{roberta_encoder.5} parent=1 // pred_check
      _
    $region11: #{roberta_encoder.5} parent=1 // pred_check_branch
      %25 = sbr.rel (0) target = $region13
    $region12: #{roberta_encoder.5} parent=1 // pred_region
      _
    $region13: #{roberta_encoder.5} parent=1 // pred_fallthru
      _
    // Predicated region
    $region14: #{roberta_encoder.5} parent=1 // pred_check
      _
    $region15: #{roberta_encoder.5} parent=1 // pred_check_branch
      %27 = sbr.rel (0) target = $region17
    $region16: #{roberta_encoder.5} parent=1 // pred_region
      _
    $region17: #{roberta_encoder.5} parent=1 // pred_fallthru
      _
    // Predicated region
    $region18: #{roberta_encoder.5} parent=1 // pred_check
      _
    $region19: #{roberta_encoder.5} parent=1 // pred_check_branch
      %29 = sbr.rel (0) target = $region21
    $region20: #{roberta_encoder.5} parent=1 // pred_region
      _
    $region21: #{roberta_encoder.5} parent=1 // pred_fallthru
      _
    // Predicated region
    $region22: #{roberta_encoder.5} parent=1 // pred_check
      _
    $region23: #{roberta_encoder.5} parent=1 // pred_check_branch
      %31 = sbr.rel (0) target = $region25
    $region24: #{roberta_encoder.5} parent=1 // pred_region
      _
    $region25: #{roberta_encoder.5} parent=1 // pred_fallthru
      _
    // Predicated region
    $region26: #{roberta_encoder.5} parent=1 // pred_check
      _
    $region27: #{roberta_encoder.5} parent=1 // pred_check_branch
      %33 = sbr.rel (0) target = $region29
    $region28: #{roberta_encoder.5} parent=1 // pred_region
      _
    $region29: #{roberta_encoder.5} parent=1 // pred_fallthru
      _
    // Predicated region
    $region30: #{roberta_encoder.5} parent=1 // pred_check
      _
    $region31: #{roberta_encoder.5} parent=1 // pred_check_branch
      %35 = sbr.rel (0) target = $region33
    $region32: #{roberta_encoder.5} parent=1 // pred_region
      _
    $region33: #{roberta_encoder.5} parent=1 // pred_fallthru
      _
    // Predicated region
    $region34: #{roberta_encoder.5} parent=1 // pred_check
      _
    $region35: #{roberta_encoder.5} parent=1 // pred_check_branch
      %37 = sbr.rel (0) target = $region37
    $region36: #{roberta_encoder.5} parent=1 // pred_region
      _
    $region37: #{roberta_encoder.5} parent=1 // pred_fallthru
      _
    // Predicated region
    $region38: #{roberta_encoder.5} parent=1 // pred_check
      _
    $region39: #{roberta_encoder.5} parent=1 // pred_check_branch
      %39 = sbr.rel (0) target = $region41
    $region40: #{roberta_encoder.5} parent=1 // pred_region
      _
    $region41: #{roberta_encoder.5} parent=1 // pred_fallthru
      _
    // Predicated region
    $region42: #{roberta_encoder.5} parent=1 // pred_check
      _
    $region43: #{roberta_encoder.5} parent=1 // pred_check_branch
      %41 = sbr.rel (0) target = $region45
    $region44: #{roberta_encoder.5} parent=1 // pred_region
      _
    $region45: #{roberta_encoder.5} parent=1 // pred_fallthru
      _
    // Predicated region
    $region46: #{roberta_encoder.5} parent=1 // pred_check
      _
    $region47: #{roberta_encoder.5} parent=1 // pred_check_branch
      %43 = sbr.rel (0) target = $region49
    $region48: #{roberta_encoder.5} parent=1 // pred_region
      _
    $region49: #{roberta_encoder.5} parent=1 // pred_fallthru
      _
    // Predicated region
    $region50: #{roberta_encoder.5} parent=1 // pred_check
      _
    $region51: #{roberta_encoder.5} parent=1 // pred_check_branch
      %45 = sbr.rel (0) target = $region53
    $region52: #{roberta_encoder.5} parent=1 // pred_region
      _
    $region53: #{roberta_encoder.5} parent=1 // pred_fallthru
      _
    // Predicated region
    $region54: #{roberta_encoder.5} parent=1 // pred_check
      _
    $region55: #{roberta_encoder.5} parent=1 // pred_check_branch
      %47 = sbr.rel (0) target = $region57
    $region56: #{roberta_encoder.5} parent=1 // pred_region
      _
    $region57: #{roberta_encoder.5} parent=1 // pred_fallthru
      _
    %v48 = vld [vmem:[%s0] sm:$0xff]
    %v49 = vld [vmem:[%s0 + $0x8] sm:$0xff]
    %v50 = vld [vmem:[%s2] sm:$0xff]
    %v51 = vld [vmem:[%s2 + $0x8] sm:$0xff]
    %v52 = vld [vmem:[%s2 + $0x10] sm:$0xff]
    %v53 = vld [vmem:[%s2 + $0x18] sm:$0xff]
    %v54 = vld [vmem:[%s3] sm:$0x1]
    %v56 = vperm.slane %v54, 0
    %vm58 = vcmask 261120
    %v60 = vsel %vm58, %v48, 0
    %v63 = vsel %vm58, %v49, 0
    %65 = vmatpush.msra.mxu0 0.0
    %66 = vmatpush.msra.mxu0 0.0
    %67 = vmatpush.msra.mxu0 0.0
    %68 = vmatpush.msra.mxu0 0.0
    %69 = vmatpush.msra.mxu0 0.0
    %70 = vmatpush.msra.mxu0 0.0
    %71 = vmatpush.msra.mxu0 0.0
    %72 = vmatpush.msra.mxu0 0.0
    %73 = vmatpush.msra.mxu0 0.0
    %74 = vmatpush.msra.mxu0 0.0
    %75 = vmatpush.msra.mxu0 0.0
    %76 = vmatpush.msra.mxu0 0.0
    %77 = vmatpush.msra.mxu0 %v53
    %78 = vmatpush.msra.mxu0 %v52
    %79 = vmatpush.msra.mxu0 %v51
    %80 = vmatpush.msra.mxu0 %v50
    %81 = vmatmul.f32.gmra.mxu0 %v60
    %v82 = vpop.f32.mrf.mxu0
    %v83 = vadd.f32 %v56, %v82
    %84 = vmatmul.f32.gmra.mxu0 %v63
    %v85 = vpop.f32.mrf.mxu0
    %v86 = vadd.f32 %v56, %v85
    %87 = vdwg.mxu0
    %v88 = vld [vmem:[%s1] sm:$0x3]
    %90 = vrot.lane.b32.xlu0 %v83, 96
    %v91 = vpop.permute.xlu0 %90
    %vm92 = vcmask 130048
    %v93 = vsel %vm92, %v83, 0
    %v95 = vsel %vm92, %v91, 0
    %97 = vmatpush.xpose.msra.mxu0 0.0
    %98 = vmatpush.xpose.msra.mxu0 0.0
    %99 = vmatpush.xpose.msra.mxu0 0.0
    %100 = vmatpush.xpose.msra.mxu0 0.0
    %101 = vmatpush.xpose.msra.mxu0 0.0
    %102 = vmatpush.xpose.msra.mxu0 0.0
    %103 = vmatpush.xpose.msra.mxu0 0.0
    %104 = vmatpush.xpose.msra.mxu0 0.0
    %105 = vmatpush.xpose.msra.mxu0 0.0
    %106 = vmatpush.xpose.msra.mxu0 0.0
    %107 = vmatpush.xpose.msra.mxu0 0.0
    %108 = vmatpush.xpose.msra.mxu0 0.0
    %109 = vmatpush.xpose.msra.mxu0 0.0
    %110 = vmatpush.xpose.msra.mxu0 0.0
    %111 = vmatpush.xpose.msra.mxu0 0.0
    %112 = vmatpush.xpose.msra.mxu0 %v95
    %113 = vmatmul.f32.gmra.mxu0 %v93
    %v114 = vpop.f32.mrf.mxu0
    %v115 = vadd.f32 0.0, %v114
    %116 = vdwg.mxu0
    %v117 = vmul.f32 %v115, 0.25
    %v118 = vperm.slane %v88, 0
    %v119 = vadd.f32 %v117, %v118
    %vm120 = vcmask 64512
    %v121 = vsel %vm120, %v119, -inf
    %122 = vmax.xlane.f32.xlu0 %v121
    %v123 = vpop.xlane.xlu0 %122
    %v124 = vsub.f32 %v119, %v123
    %v125 = vmul.f32 %v124, 1.442695
    %v126 = vpow.pop %v125
    %v127 = vsel %vm120, %v126, 0.0
    %128 = vadd.xlane.f32.xlu0 %v127
    %v129 = vpop.xlane.xlu0 %128
    %v130 = vrcp.pop %v129
    %v131 = vmul.f32 %v126, %v130
    %132 = vrot.lane.b32.xlu0 %v83, 64
    %v133 = vpop.permute.xlu0 %132
    %v136 = vsel %vm120, %v131, 0
    %138 = vmatpush.msra.mxu0 0.0
    %139 = vmatpush.msra.mxu0 0.0
    %140 = vmatpush.msra.mxu0 0.0
    %141 = vmatpush.msra.mxu0 0.0
    %142 = vmatpush.msra.mxu0 0.0
    %143 = vmatpush.msra.mxu0 0.0
    %144 = vmatpush.msra.mxu0 0.0
    %145 = vmatpush.msra.mxu0 0.0
    %146 = vmatpush.msra.mxu0 0.0
    %147 = vmatpush.msra.mxu0 0.0
    %148 = vmatpush.msra.mxu0 0.0
    %149 = vmatpush.msra.mxu0 0.0
    %150 = vmatpush.msra.mxu0 0.0
    %151 = vmatpush.msra.mxu0 0.0
    %152 = vmatpush.msra.mxu0 0.0
    %153 = vmatpush.msra.mxu0 %v133
    %154 = vmatmul.f32.gmra.mxu0 %v136
    %v155 = vpop.f32.mrf.mxu0
    %v156 = vadd.f32 0.0, %v155
    %157 = vdwg.mxu0
    %158 = vst.msk [vmem:[#allocation2] sm:$0xff] %vm92, %v156
    %159 = vrot.lane.b32.xlu0 %v83, 112
    %v160 = vpop.permute.xlu0 %159
    %161 = vrot.lane.b32.xlu0 %v83, 80
    %v162 = vpop.permute.xlu0 %161
    %v163 = vsel %vm92, %v160, 0
    %v165 = vsel %vm92, %v162, 0
    %167 = vmatpush.xpose.msra.mxu0 0.0
    %168 = vmatpush.xpose.msra.mxu0 0.0
    %169 = vmatpush.xpose.msra.mxu0 0.0
    %170 = vmatpush.xpose.msra.mxu0 0.0
    %171 = vmatpush.xpose.msra.mxu0 0.0
    %172 = vmatpush.xpose.msra.mxu0 0.0
    %173 = vmatpush.xpose.msra.mxu0 0.0
    %174 = vmatpush.xpose.msra.mxu0 0.0
    %175 = vmatpush.xpose.msra.mxu0 0.0
    %176 = vmatpush.xpose.msra.mxu0 0.0
    %177 = vmatpush.xpose.msra.mxu0 0.0
    %178 = vmatpush.xpose.msra.mxu0 0.0
    %179 = vmatpush.xpose.msra.mxu0 0.0
    %180 = vmatpush.xpose.msra.mxu0 0.0
    %181 = vmatpush.xpose.msra.mxu0 0.0
    %182 = vmatpush.xpose.msra.mxu0 %v165
    %183 = vmatmul.f32.gmra.mxu0 %v163
    %v184 = vpop.f32.mrf.mxu0
    %v185 = vadd.f32 0.0, %v184
    %186 = vdwg.mxu0
    %v187 = vmul.f32 %v185, 0.25
    %v188 = vadd.f32 %v187, %v118
    %v189 = vsel %vm120, %v188, -inf
    %190 = vmax.xlane.f32.xlu0 %v189
    %v191 = vpop.xlane.xlu0 %190
    %v192 = vsub.f32 %v188, %v191
    %v193 = vmul.f32 %v192, 1.442695
    %v194 = vpow.pop %v193
    %v195 = vsel %vm120, %v194, 0.0
    %196 = vadd.xlane.f32.xlu0 %v195
    %v197 = vpop.xlane.xlu0 %196
    %v198 = vrcp.pop %v197
    %v199 = vmul.f32 %v194, %v198
    %200 = vrot.lane.b32.xlu0 %v83, 48
    %v201 = vpop.permute.xlu0 %200
    %v204 = vsel %vm120, %v199, 0
    %206 = vmatpush.msra.mxu0 0.0
    %207 = vmatpush.msra.mxu0 0.0
    %208 = vmatpush.msra.mxu0 0.0
    %209 = vmatpush.msra.mxu0 0.0
    %210 = vmatpush.msra.mxu0 0.0
    %211 = vmatpush.msra.mxu0 0.0
    %212 = vmatpush.msra.mxu0 0.0
    %213 = vmatpush.msra.mxu0 0.0
    %214 = vmatpush.msra.mxu0 0.0
    %215 = vmatpush.msra.mxu0 0.0
    %216 = vmatpush.msra.mxu0 0.0
    %217 = vmatpush.msra.mxu0 0.0
    %218 = vmatpush.msra.mxu0 0.0
    %219 = vmatpush.msra.mxu0 0.0
    %220 = vmatpush.msra.mxu0 0.0
    %221 = vmatpush.msra.mxu0 %v201
    %222 = vmatmul.f32.gmra.mxu0 %v204
    %v223 = vpop.f32.mrf.mxu0
    %v224 = vadd.f32 0.0, %v223
    %225 = vdwg.mxu0
    %227 = vrot.lane.b32.xlu0 %v224, 16
    %v228 = vpop.permute.xlu0 %227
    %vm230 = vcmask 261248
    %231 = vst.msk [vmem:[#allocation2] sm:$0xff] %vm230, %v228
    %233 = vrot.lane.b32.xlu0 %v86, 96
    %v234 = vpop.permute.xlu0 %233
    %v235 = vsel %vm92, %v86, 0
    %v237 = vsel %vm92, %v234, 0
    %239 = vmatpush.xpose.msra.mxu0 0.0
    %240 = vmatpush.xpose.msra.mxu0 0.0
    %241 = vmatpush.xpose.msra.mxu0 0.0
    %242 = vmatpush.xpose.msra.mxu0 0.0
    %243 = vmatpush.xpose.msra.mxu0 0.0
    %244 = vmatpush.xpose.msra.mxu0 0.0
    %245 = vmatpush.xpose.msra.mxu0 0.0
    %246 = vmatpush.xpose.msra.mxu0 0.0
    %247 = vmatpush.xpose.msra.mxu0 0.0
    %248 = vmatpush.xpose.msra.mxu0 0.0
    %249 = vmatpush.xpose.msra.mxu0 0.0
    %250 = vmatpush.xpose.msra.mxu0 0.0
    %251 = vmatpush.xpose.msra.mxu0 0.0
    %252 = vmatpush.xpose.msra.mxu0 0.0
    %253 = vmatpush.xpose.msra.mxu0 0.0
    %254 = vmatpush.xpose.msra.mxu0 %v237
    %255 = vmatmul.f32.gmra.mxu0 %v235
    %v256 = vpop.f32.mrf.mxu0
    %v257 = vadd.f32 0.0, %v256
    %258 = vdwg.mxu0
    %v259 = vmul.f32 %v257, 0.25
    %v260 = vperm.slane %v88, 1
    %v261 = vadd.f32 %v259, %v260
    %v262 = vsel %vm120, %v261, -inf
    %263 = vmax.xlane.f32.xlu0 %v262
    %v264 = vpop.xlane.xlu0 %263
    %v265 = vsub.f32 %v261, %v264
    %v266 = vmul.f32 %v265, 1.442695
    %v267 = vpow.pop %v266
    %v268 = vsel %vm120, %v267, 0.0
    %269 = vadd.xlane.f32.xlu0 %v268
    %v270 = vpop.xlane.xlu0 %269
    %v271 = vrcp.pop %v270
    %v272 = vmul.f32 %v267, %v271
    %273 = vrot.lane.b32.xlu0 %v86, 64
    %v274 = vpop.permute.xlu0 %273
    %v277 = vsel %vm120, %v272, 0
    %279 = vmatpush.msra.mxu0 0.0
    %280 = vmatpush.msra.mxu0 0.0
    %281 = vmatpush.msra.mxu0 0.0
    %282 = vmatpush.msra.mxu0 0.0
    %283 = vmatpush.msra.mxu0 0.0
    %284 = vmatpush.msra.mxu0 0.0
    %285 = vmatpush.msra.mxu0 0.0
    %286 = vmatpush.msra.mxu0 0.0
    %287 = vmatpush.msra.mxu0 0.0
    %288 = vmatpush.msra.mxu0 0.0
    %289 = vmatpush.msra.mxu0 0.0
    %290 = vmatpush.msra.mxu0 0.0
    %291 = vmatpush.msra.mxu0 0.0
    %292 = vmatpush.msra.mxu0 0.0
    %293 = vmatpush.msra.mxu0 0.0
    %294 = vmatpush.msra.mxu0 %v274
    %295 = vmatmul.f32.gmra.mxu0 %v277
    %v296 = vpop.f32.mrf.mxu0
    %v297 = vadd.f32 0.0, %v296
    %298 = vdwg.mxu0
    %299 = vst.msk [vmem:[#allocation2 + $0x8] sm:$0xff] %vm92, %v297
    %300 = vrot.lane.b32.xlu0 %v86, 112
    %v301 = vpop.permute.xlu0 %300
    %302 = vrot.lane.b32.xlu0 %v86, 80
    %v303 = vpop.permute.xlu0 %302
    %v304 = vsel %vm92, %v301, 0
    %v306 = vsel %vm92, %v303, 0
    %308 = vmatpush.xpose.msra.mxu0 0.0
    %309 = vmatpush.xpose.msra.mxu0 0.0
    %310 = vmatpush.xpose.msra.mxu0 0.0
    %311 = vmatpush.xpose.msra.mxu0 0.0
    %312 = vmatpush.xpose.msra.mxu0 0.0
    %313 = vmatpush.xpose.msra.mxu0 0.0
    %314 = vmatpush.xpose.msra.mxu0 0.0
    %315 = vmatpush.xpose.msra.mxu0 0.0
    %316 = vmatpush.xpose.msra.mxu0 0.0
    %317 = vmatpush.xpose.msra.mxu0 0.0
    %318 = vmatpush.xpose.msra.mxu0 0.0
    %319 = vmatpush.xpose.msra.mxu0 0.0
    %320 = vmatpush.xpose.msra.mxu0 0.0
    %321 = vmatpush.xpose.msra.mxu0 0.0
    %322 = vmatpush.xpose.msra.mxu0 0.0
    %323 = vmatpush.xpose.msra.mxu0 %v306
    %324 = vmatmul.f32.gmra.mxu0 %v304
    %v325 = vpop.f32.mrf.mxu0
    %v326 = vadd.f32 0.0, %v325
    %327 = vdwg.mxu0
    %v328 = vmul.f32 %v326, 0.25
    %v329 = vadd.f32 %v328, %v260
    %v330 = vsel %vm120, %v329, -inf
    %331 = vmax.xlane.f32.xlu0 %v330
    %v332 = vpop.xlane.xlu0 %331
    %v333 = vsub.f32 %v329, %v332
    %v334 = vmul.f32 %v333, 1.442695
    %v335 = vpow.pop %v334
    %v336 = vsel %vm120, %v335, 0.0
    %337 = vadd.xlane.f32.xlu0 %v336
    %v338 = vpop.xlane.xlu0 %337
    %v339 = vrcp.pop %v338
    %v340 = vmul.f32 %v335, %v339
    %341 = vrot.lane.b32.xlu0 %v86, 48
    %v342 = vpop.permute.xlu0 %341
    %v345 = vsel %vm120, %v340, 0
    %347 = vmatpush.msra.mxu0 0.0
    %348 = vmatpush.msra.mxu0 0.0
    %349 = vmatpush.msra.mxu0 0.0
    %350 = vmatpush.msra.mxu0 0.0
    %351 = vmatpush.msra.mxu0 0.0
    %352 = vmatpush.msra.mxu0 0.0
    %353 = vmatpush.msra.mxu0 0.0
    %354 = vmatpush.msra.mxu0 0.0
    %355 = vmatpush.msra.mxu0 0.0
    %356 = vmatpush.msra.mxu0 0.0
    %357 = vmatpush.msra.mxu0 0.0
    %358 = vmatpush.msra.mxu0 0.0
    %359 = vmatpush.msra.mxu0 0.0
    %360 = vmatpush.msra.mxu0 0.0
    %361 = vmatpush.msra.mxu0 0.0
    %362 = vmatpush.msra.mxu0 %v342
    %363 = vmatmul.f32.gmra.mxu0 %v345
    %v364 = vpop.f32.mrf.mxu0
    %v365 = vadd.f32 0.0, %v364
    %366 = vdwg.mxu0
    %368 = vrot.lane.b32.xlu0 %v365, 16
    %v369 = vpop.permute.xlu0 %368
    %371 = vst.msk [vmem:[#allocation2 + $0x8] sm:$0xff] %vm230, %v369
    %v372 = vld [vmem:[#allocation2] sm:$0xff]
    %v373 = vld [vmem:[#allocation2 + $0x8] sm:$0xff]
    %v374 = vld [vmem:[%s4] sm:$0xff]
    %v375 = vld [vmem:[%s4 + $0x8] sm:$0xff]
    %v376 = vld [vmem:[%s4 + $0x10] sm:$0xff]
    %v377 = vld [vmem:[%s4 + $0x18] sm:$0xff]
    %v378 = vld [vmem:[%s5] sm:$0x1]
    %v380 = vperm.slane %v378, 0
    %v383 = vsel %vm58, %v372, 0
    %v386 = vsel %vm58, %v373, 0
    %388 = vmatpush.msra.mxu0 0.0
    %389 = vmatpush.msra.mxu0 0.0
    %390 = vmatpush.msra.mxu0 0.0
    %391 = vmatpush.msra.mxu0 0.0
    %392 = vmatpush.msra.mxu0 0.0
    %393 = vmatpush.msra.mxu0 0.0
    %394 = vmatpush.msra.mxu0 0.0
    %395 = vmatpush.msra.mxu0 0.0
    %396 = vmatpush.msra.mxu0 0.0
    %397 = vmatpush.msra.mxu0 0.0
    %398 = vmatpush.msra.mxu0 0.0
    %399 = vmatpush.msra.mxu0 0.0
    %400 = vmatpush.msra.mxu0 %v377
    %401 = vmatpush.msra.mxu0 %v376
    %402 = vmatpush.msra.mxu0 %v375
    %403 = vmatpush.msra.mxu0 %v374
    %404 = vmatmul.f32.gmra.mxu0 %v383
    %v405 = vpop.f32.mrf.mxu0
    %v406 = vadd.f32 %v380, %v405
    %407 = vmatmul.f32.gmra.mxu0 %v386
    %v408 = vpop.f32.mrf.mxu0
    %v409 = vadd.f32 %v380, %v408
    %410 = vdwg.mxu0
    %v411 = vadd.f32 %v406, %v48
    %v412 = vadd.f32 %v409, %v49
    %v413 = vld [vmem:[%s6] sm:$0x1]
    %v414 = vld [vmem:[%s7] sm:$0x1]
    %v415 = vsel %vm58, %v411, 0.0
    %416 = vadd.xlane.f32.xlu0 %v415
    %v417 = vpop.xlane.xlu0 %416
    %v418 = vsel %vm58, %v412, 0.0
    %419 = vadd.xlane.f32.xlu0 %v418
    %v420 = vpop.xlane.xlu0 %419
    %v421 = vrcp.pop 32.0
    %v422 = vmul.f32 32.0, %v421
    %v423 = vsub.f32 1.0, %v422
    %v424 = vmul.f32 %v421, %v423
    %v425 = vadd.f32 %v421, %v424
    %vm426 = vweird.f32 %v421
    %v427 = vsel %vm426, %v421, %v425
    %v428 = vmul.f32 %v417, %v427
    %v429 = vmul.f32 %v420, %v427
    %v430 = vsub.f32 %v411, %v428
    %v431 = vsub.f32 %v412, %v429
    %v432 = vmul.f32 %v430, %v430
    %v433 = vmul.f32 %v431, %v431
    %v434 = vsel %vm58, %v432, 0.0
    %435 = vadd.xlane.f32.xlu0 %v434
    %v436 = vpop.xlane.xlu0 %435
    %v437 = vsel %vm58, %v433, 0.0
    %438 = vadd.xlane.f32.xlu0 %v437
    %v439 = vpop.xlane.xlu0 %438
    %v440 = vmul.f32 %v436, %v427
    %v441 = vmul.f32 %v439, %v427
    %v442 = vadd.f32 %v440, 1e-05
    %v443 = vadd.f32 %v441, 1e-05
    %v444 = vrsqrt.pop %v442
    %v445 = vmul.f32 %v444, %v442
    %v446 = vmul.f32 %v445, %v444
    %v447 = vmul.f32 0.5, %v446
    %v448 = vsub.f32 1.5, %v447
    %v449 = vmul.f32 %v444, %v448
    %vm450 = vweird.f32 %v442
    %vm451 = vweird.f32 %v444
    %vm452 = vmor %vm450, %vm451
    %v453 = vsel %vm452, %v444, %v449
    %v454 = vrsqrt.pop %v443
    %v455 = vmul.f32 %v454, %v443
    %v456 = vmul.f32 %v455, %v454
    %v457 = vmul.f32 0.5, %v456
    %v458 = vsub.f32 1.5, %v457
    %v459 = vmul.f32 %v454, %v458
    %vm460 = vweird.f32 %v443
    %vm461 = vweird.f32 %v454
    %vm462 = vmor %vm460, %vm461
    %v463 = vsel %vm462, %v454, %v459
    %v464 = vmul.f32 %v430, %v453
    %v465 = vmul.f32 %v431, %v463
    %v467 = vperm.slane %v413, 0
    %v469 = vmul.f32 %v464, %v467
    %v470 = vmul.f32 %v465, %v467
    %v472 = vperm.slane %v414, 0
    %v474 = vadd.f32 %v469, %v472
    %v475 = vadd.f32 %v470, %v472
    %v476 = vld [vmem:[%s8] sm:$0xff]
    %v477 = vld [vmem:[%s8 + $0x8] sm:$0xff]
    %v478 = vld [vmem:[%s8 + $0x10] sm:$0xff]
    %v479 = vld [vmem:[%s8 + $0x18] sm:$0xff]
    %v480 = vld [vmem:[%s9] sm:$0x1]
    %v482 = vperm.slane %v480, 0
    %v485 = vsel %vm58, %v474, 0
    %v488 = vsel %vm58, %v475, 0
    %490 = vmatpush.msra.mxu0 0.0
    %491 = vmatpush.msra.mxu0 0.0
    %492 = vmatpush.msra.mxu0 0.0
    %493 = vmatpush.msra.mxu0 0.0
    %494 = vmatpush.msra.mxu0 0.0
    %495 = vmatpush.msra.mxu0 0.0
    %496 = vmatpush.msra.mxu0 0.0
    %497 = vmatpush.msra.mxu0 0.0
    %498 = vmatpush.msra.mxu0 0.0
    %499 = vmatpush.msra.mxu0 0.0
    %500 = vmatpush.msra.mxu0 0.0
    %501 = vmatpush.msra.mxu0 0.0
    %502 = vmatpush.msra.mxu0 %v479
    %503 = vmatpush.msra.mxu0 %v478
    %504 = vmatpush.msra.mxu0 %v477
    %505 = vmatpush.msra.mxu0 %v476
    %506 = vmatmul.f32.gmra.mxu0 %v485
    %v507 = vpop.f32.mrf.mxu0
    %v508 = vadd.f32 %v482, %v507
    %509 = vmatmul.f32.gmra.mxu0 %v488
    %v510 = vpop.f32.mrf.mxu0
    %v511 = vadd.f32 %v482, %v510
    %512 = vdwg.mxu0
    %v513 = vmul.f32 %v508, 0.5
    %v514 = vmul.f32 %v511, 0.5
    %v515 = vmul.f32 %v508, 0.044715
    %v516 = vmul.f32 %v511, 0.044715
    %v517 = vmul.f32 %v515, %v508
    %v518 = vmul.f32 %v516, %v511
    %v519 = vmul.f32 %v517, %v508
    %v520 = vmul.f32 %v518, %v511
    %v521 = vadd.f32 %v508, %v519
    %v522 = vadd.f32 %v511, %v520
    %v523 = vmul.f32 %v521, 0.7978846
    %v524 = vmul.f32 %v522, 0.7978846
    %v525 = vtanh.pop %v523
    %v526 = vtanh.pop %v524
    %v527 = vadd.f32 %v525, 1.0
    %v528 = vadd.f32 %v526, 1.0
    %v529 = vmul.f32 %v513, %v527
    %v530 = vmul.f32 %v514, %v528
    %v531 = vld [vmem:[%s10] sm:$0xff]
    %v532 = vld [vmem:[%s10 + $0x8] sm:$0xff]
    %v533 = vld [vmem:[%s10 + $0x10] sm:$0xff]
    %v534 = vld [vmem:[%s10 + $0x18] sm:$0xff]
    %v535 = vld [vmem:[%s10 + $0x20] sm:$0xff]
    %v536 = vld [vmem:[%s10 + $0x28] sm:$0xff]
    %v537 = vld [vmem:[%s10 + $0x30] sm:$0xff]
    %v538 = vld [vmem:[%s10 + $0x38] sm:$0xff]
    %v539 = vld [vmem:[%s11] sm:$0x1]
    %v541 = vperm.slane %v539, 0
    %vm543 = vcmask 523264
    %v545 = vsel %vm543, %v529, 0
    %v548 = vsel %vm543, %v530, 0
    %550 = vmatpush.msra.mxu0 0.0
    %551 = vmatpush.msra.mxu0 0.0
    %552 = vmatpush.msra.mxu0 0.0
    %553 = vmatpush.msra.mxu0 0.0
    %554 = vmatpush.msra.mxu0 0.0
    %555 = vmatpush.msra.mxu0 0.0
    %556 = vmatpush.msra.mxu0 0.0
    %557 = vmatpush.msra.mxu0 0.0
    %558 = vmatpush.msra.mxu0 %v538
    %559 = vmatpush.msra.mxu0 %v537
    %560 = vmatpush.msra.mxu0 %v536
    %561 = vmatpush.msra.mxu0 %v535
    %562 = vmatpush.msra.mxu0 %v534
    %563 = vmatpush.msra.mxu0 %v533
    %564 = vmatpush.msra.mxu0 %v532
    %565 = vmatpush.msra.mxu0 %v531
    %566 = vmatmul.f32.gmra.mxu0 %v545
    %v567 = vpop.f32.mrf.mxu0
    %v568 = vadd.f32 %v541, %v567
    %569 = vmatmul.f32.gmra.mxu0 %v548
    %v570 = vpop.f32.mrf.mxu0
    %v571 = vadd.f32 %v541, %v570
    %572 = vdwg.mxu0
    %v573 = vadd.f32 %v568, %v474
    %v574 = vadd.f32 %v571, %v475
    %v575 = vld [vmem:[%s12] sm:$0x1]
    %v576 = vld [vmem:[%s13] sm:$0x1]
    %v577 = vsel %vm58, %v573, 0.0
    %578 = vadd.xlane.f32.xlu0 %v577
    %v579 = vpop.xlane.xlu0 %578
    %v580 = vsel %vm58, %v574, 0.0
    %581 = vadd.xlane.f32.xlu0 %v580
    %v582 = vpop.xlane.xlu0 %581
    %v583 = vmul.f32 %v579, %v427
    %v584 = vmul.f32 %v582, %v427
    %v585 = vsub.f32 %v573, %v583
    %v586 = vsub.f32 %v574, %v584
    %v587 = vmul.f32 %v585, %v585
    %v588 = vmul.f32 %v586, %v586
    %v589 = vsel %vm58, %v587, 0.0
    %590 = vadd.xlane.f32.xlu0 %v589
    %v591 = vpop.xlane.xlu0 %590
    %v592 = vsel %vm58, %v588, 0.0
    %593 = vadd.xlane.f32.xlu0 %v592
    %v594 = vpop.xlane.xlu0 %593
    %v595 = vmul.f32 %v591, %v427
    %v596 = vmul.f32 %v594, %v427
    %v597 = vadd.f32 %v595, 1e-05
    %v598 = vadd.f32 %v596, 1e-05
    %v599 = vrsqrt.pop %v597
    %v600 = vmul.f32 %v599, %v597
    %v601 = vmul.f32 %v600, %v599
    %v602 = vmul.f32 0.5, %v601
    %v603 = vsub.f32 1.5, %v602
    %v604 = vmul.f32 %v599, %v603
    %vm605 = vweird.f32 %v597
    %vm606 = vweird.f32 %v599
    %vm607 = vmor %vm605, %vm606
    %v608 = vsel %vm607, %v599, %v604
    %v609 = vrsqrt.pop %v598
    %v610 = vmul.f32 %v609, %v598
    %v611 = vmul.f32 %v610, %v609
    %v612 = vmul.f32 0.5, %v611
    %v613 = vsub.f32 1.5, %v612
    %v614 = vmul.f32 %v609, %v613
    %vm615 = vweird.f32 %v598
    %vm616 = vweird.f32 %v609
    %vm617 = vmor %vm615, %vm616
    %v618 = vsel %vm617, %v609, %v614
    %v619 = vmul.f32 %v585, %v608
    %v620 = vmul.f32 %v586, %v618
    %v622 = vperm.slane %v575, 0
    %v624 = vmul.f32 %v619, %v622
    %v625 = vmul.f32 %v620, %v622
    %v627 = vperm.slane %v576, 0
    %v629 = vadd.f32 %v624, %v627
    %v630 = vadd.f32 %v625, %v627
    %631 = vst.msk [vmem:[#allocation3] sm:$0xff] %vm58, %v629
    %632 = vst.msk [vmem:[#allocation3 + $0x8] sm:$0xff] %vm58, %v630
    // Predicated region
    $region58: #{roberta_encoder.5} parent=1 // pred_check
      _
    $region59: #{roberta_encoder.5} parent=1 // pred_check_branch
      %634 = sbr.rel (0) target = $region61
    $region60: #{roberta_encoder.5} parent=1 // pred_region
      %636 = vsyncadd [#allocation4], 0
      %s637 = sshll.u32 [#allocation3], 4
      %s638 = int_to_ptr.vmem [resolvable:$true] %s637
      %s639 = sshll.u32 %s14, 4
      %s640 = int_to_ptr.hbm [resolvable:$true] %s639
      %645 = dma.vmem_to_hbm [thread:$0]  %s638, 256, %s640, [#allocation4], 128, 128, 8
    $region61: #{roberta_encoder.5} parent=1 // pred_fallthru
      _
    // Predicated region
    $region62: #{roberta_encoder.5} parent=1 // pred_check
      _
    $region63: #{roberta_encoder.5} parent=1 // pred_check_branch
      %647 = sbr.rel (0) target = $region65
    $region64: #{roberta_encoder.5} parent=1 // pred_region
      %649 = dma.done [#allocation4], 256
    $region65: #{roberta_encoder.5} parent=1 // pred_fallthru
      _
    %650 = vsyncpa [#allocation4], 1

</llo_original>
